<compile_context>
chip_gen: v5e
topology: v5e:2x2
jax: 0.10.0
libtpu: 0.0.40
codegen_flags: <defaults>
</compile_context>

<pallas_src>
import functools
import math

import jax
import jax.numpy as jnp
from jax.experimental import pallas as pl
from jax.experimental.pallas import tpu as pltpu


def _round_up(x, m):
    return (x + m - 1) // m * m


def _word_gather_kernel(ids_ref, mask_ref, emb_hbm, out_ref, rows, sems):
    """One grid step == one tile of T flattened (batch*seq) tokens.

    ids_ref  : SMEM (N_pad,)  int32    scalar-prefetched, flattened token ids
    mask_ref : VMEM (T, 1)    float32  1.0 where pos < text_len, else 0.0
    emb_hbm  : HBM  (V, D)             embedding table (no auto-DMA)
    out_ref  : VMEM (T, D)    float32  masked embeddings for this tile
    rows     : VMEM (T, D)             DMA gather landing buffer
    sems     : DMA semaphores (T,)     one per in-flight row copy
    """
    t = pl.program_id(0)
    T, _ = out_ref.shape
    base = t * T

    # Issue all row-gather DMAs for this tile (several in flight), then wait.
    copies = []
    for i in range(T):                              # static unroll (T is static)
        row_id = ids_ref[base + i]
        cp = pltpu.make_async_copy(
            emb_hbm.at[pl.ds(row_id, 1), :],        # one (1, D) table row in HBM
            rows.at[pl.ds(i, 1), :],                # its slot in the VMEM buffer
            sems.at[i],
        )
        cp.start()
        copies.append(cp)
    for cp in copies:
        cp.wait()

    # Fused length mask: single (T,1)*(T,D) VPU multiply on the gathered rows.
    out_ref[...] = (rows[...].astype(jnp.float32) * mask_ref[...]).astype(out_ref.dtype)


@functools.partial(jax.jit, static_argnames=("tokens_per_tile",))
def word_encoder_forward(text_vecs, text_lens, embed_table, tokens_per_tile=None):
    """text_vecs: (B, L) int, text_lens: (B,) int, embed_table: (V, D) float32.

    Returns (B, L, D) float32, identical to WordEncoder.forward.
    """
    B, L = text_vecs.shape
    V, D = embed_table.shape
    N = B * L

    if tokens_per_tile is None:
        # Enough rows per grid step to amortize pipeline overhead while keeping
        # the number of in-flight DMAs / semaphores per step modest.
        tokens_per_tile = min(32, _round_up(N, 8))
    T = int(tokens_per_tile)
    n_pad = _round_up(N, T)
    n_tiles = n_pad // T

    # Flatten (B, L) -> (N,).  Clamp out-of-range ids (PyTorch nn.Embedding
    # would raise; clamping guarantees the DMA never reads outside the table),
    # then pad to a whole number of tiles (padded rows are masked to zero and
    # sliced off below).
    ids = jnp.clip(text_vecs.reshape(N).astype(jnp.int32), 0, V - 1)
    ids = jnp.pad(ids, (0, n_pad - N))

    # Per-token validity mask (seq position < text_len), padded rows -> 0.
    mask = (jnp.arange(L, dtype=jnp.int32)[None, :]
            < text_lens.astype(jnp.int32)[:, None]).reshape(N)
    mask = jnp.pad(mask, (0, n_pad - N)).astype(jnp.float32).reshape(n_pad, 1)

    grid_spec = pltpu.PrefetchScalarGridSpec(
        num_scalar_prefetch=1,                              # ids -> SMEM
        grid=(n_tiles,),
        in_specs=[
            pl.BlockSpec((T, 1), lambda t, ids: (t, 0)),    # mask tile
            pl.BlockSpec(memory_space=pl.ANY),              # table stays in HBM
        ],
        out_specs=pl.BlockSpec((T, D), lambda t, ids: (t, 0)),
        scratch_shapes=[
            pltpu.VMEM((T, D), embed_table.dtype),          # gather landing buffer
            pltpu.SemaphoreType.DMA((T,)),                  # one sem per row copy
        ],
    )

    out = pl.pallas_call(
        _word_gather_kernel,
        out_shape=jax.ShapeDtypeStruct((n_pad, D), jnp.float32),
        grid_spec=grid_spec,
        compiler_params=pltpu.CompilerParams(
            dimension_semantics=("parallel",)),             # v7x: tiles split across TCs
    )(ids, mask, embed_table.astype(jnp.float32))

    return out[:N].reshape(B, L, D)


def make_embedding_table(key, num_word, embed_dim):
    """Deterministic stand-in for nn.init.kaiming_uniform_ on (num_word, embed_dim)."""
    fan_in = embed_dim
    gain = math.sqrt(2.0)                      # kaiming_uniform_ default (a=0, leaky_relu)
    bound = gain * math.sqrt(3.0 / fan_in)
    return jax.random.uniform(key, (num_word, embed_dim),
                              dtype=jnp.float32, minval=-bound, maxval=bound)


if __name__ == "__main__":
    # Small, module-consistent shapes.
    num_word, embed_dim = 64, 32
    batch_size, text_max_len = 2, 8

    key = jax.random.PRNGKey(0)
    k_emb, k_ids, _ = jax.random.split(key, 3)

    embed_table = make_embedding_table(k_emb, num_word, embed_dim)
    text_vecs = jax.random.randint(k_ids, (batch_size, text_max_len), 0, num_word,
                                   dtype=jnp.int32)
    text_lens = jnp.array([5, 8], dtype=jnp.int32)   # (batch_size,)

    out = word_encoder_forward(text_vecs, text_lens, embed_table)
    out = jax.block_until_ready(out)

    # Plain-JAX reference (same semantics as the PyTorch forward).
    ref = embed_table[text_vecs]                                     # (B, L, D)
    mask = (jnp.arange(text_max_len)[None, :] < text_lens[:, None])  # (B, L)
    ref = ref * mask[:, :, None].astype(jnp.float32)

    assert out.shape == (batch_size, text_max_len, embed_dim)
    assert jnp.allclose(out, ref, atol=1e-6), "mismatch vs reference"
    print("KERNEL_OK")
</pallas_src>

<mosaic_0001>
module attributes {stable_mosaic.version = 11 : i64} {
  func.func @_word_gather_kernel(%arg0: i32, %arg1: memref<16xi32, #tpu.memory_space<smem>>, %arg2: memref<16x1xf32, #tpu.memory_space<vmem>>, %arg3: memref<64x32xf32, #tpu.memory_space<any>>, %arg4: memref<16x32xf32, #tpu.memory_space<vmem>>, %arg5: memref<16x32xf32, #tpu.memory_space<vmem>>, %arg6: memref<16x!tpu.dma_semaphore, #tpu.memory_space<semaphore_mem>>) attributes {dimension_semantics = [#tpu.dimension_semantics<parallel>], iteration_bounds = array<i64: 1>, scalar_prefetch = 1 : i64, scratch_operands = 2 : i64, tpu.core_type = #tpu.core_type<tc>, window_params = [{transform_indices = @transform_0, window_bounds = array<i64: 16, 1>}, {}, {transform_indices = @transform_2, window_bounds = array<i64: 16, 32>}]} {
    %c16_i32 = arith.constant 16 : i32
    %0 = arith.muli %arg0, %c16_i32 : i32
    %c0_i32 = arith.constant 0 : i32
    %1 = arith.addi %0, %c0_i32 : i32
    %2 = arith.index_cast %1 : i32 to index
    %3 = memref.load %arg1[%2] : memref<16xi32, #tpu.memory_space<smem>>
    %c0_i32_0 = arith.constant 0 : i32
    %c0_i32_1 = arith.constant 0 : i32
    %4 = tpu.memref_slice %arg3[%3, %c0_i32_1] : memref<64x32xf32, #tpu.memory_space<any>> -> memref<1x32xf32, #tpu.memory_space<any>>
    %c0_i32_2 = arith.constant 0 : i32
    %c0_i32_3 = arith.constant 0 : i32
    %5 = tpu.memref_slice %arg5[%c0_i32_2, %c0_i32_3] : memref<16x32xf32, #tpu.memory_space<vmem>> -> memref<1x32xf32, #tpu.memory_space<vmem>>
    %6 = tpu.memref_slice %arg6[%c0_i32_0] : memref<16x!tpu.dma_semaphore, #tpu.memory_space<semaphore_mem>> -> memref<1x!tpu.dma_semaphore, #tpu.memory_space<semaphore_mem>>
    %7 = tpu.memref_squeeze %6 : memref<1x!tpu.dma_semaphore, #tpu.memory_space<semaphore_mem>> -> memref<!tpu.dma_semaphore, #tpu.memory_space<semaphore_mem>>
    tpu.enqueue_dma source(%4 : memref<1x32xf32, #tpu.memory_space<any>>) target(%5 : memref<1x32xf32, #tpu.memory_space<vmem>>) target_semaphore(%7 : memref<!tpu.dma_semaphore, #tpu.memory_space<semaphore_mem>>)
    %c1_i32 = arith.constant 1 : i32
    %8 = arith.addi %0, %c1_i32 : i32
    %9 = arith.index_cast %8 : i32 to index
    %10 = memref.load %arg1[%9] : memref<16xi32, #tpu.memory_space<smem>>
    %c1_i32_4 = arith.constant 1 : i32
    %c0_i32_5 = arith.constant 0 : i32
    %11 = tpu.memref_slice %arg3[%10, %c0_i32_5] : memref<64x32xf32, #tpu.memory_space<any>> -> memref<1x32xf32, #tpu.memory_space<any>>
    %c1_i32_6 = arith.constant 1 : i32
    %c0_i32_7 = arith.constant 0 : i32
    %12 = tpu.memref_slice %arg5[%c1_i32_6, %c0_i32_7] : memref<16x32xf32, #tpu.memory_space<vmem>> -> memref<1x32xf32, #tpu.memory_space<vmem>>
    %13 = tpu.memref_slice %arg6[%c1_i32_4] : memref<16x!tpu.dma_semaphore, #tpu.memory_space<semaphore_mem>> -> memref<1x!tpu.dma_semaphore, #tpu.memory_space<semaphore_mem>>
    %14 = tpu.memref_squeeze %13 : memref<1x!tpu.dma_semaphore, #tpu.memory_space<semaphore_mem>> -> memref<!tpu.dma_semaphore, #tpu.memory_space<semaphore_mem>>
    tpu.enqueue_dma source(%11 : memref<1x32xf32, #tpu.memory_space<any>>) target(%12 : memref<1x32xf32, #tpu.memory_space<vmem>>) target_semaphore(%14 : memref<!tpu.dma_semaphore, #tpu.memory_space<semaphore_mem>>)
    %c2_i32 = arith.constant 2 : i32
    %15 = arith.addi %0, %c2_i32 : i32
    %16 = arith.index_cast %15 : i32 to index
    %17 = memref.load %arg1[%16] : memref<16xi32, #tpu.memory_space<smem>>
    %c2_i32_8 = arith.constant 2 : i32
    %c0_i32_9 = arith.constant 0 : i32
    %18 = tpu.memref_slice %arg3[%17, %c0_i32_9] : memref<64x32xf32, #tpu.memory_space<any>> -> memref<1x32xf32, #tpu.memory_space<any>>
    %c2_i32_10 = arith.constant 2 : i32
    %c0_i32_11 = arith.constant 0 : i32
    %19 = tpu.memref_slice %arg5[%c2_i32_10, %c0_i32_11] : memref<16x32xf32, #tpu.memory_space<vmem>> -> memref<1x32xf32, #tpu.memory_space<vmem>>
    %20 = tpu.memref_slice %arg6[%c2_i32_8] : memref<16x!tpu.dma_semaphore, #tpu.memory_space<semaphore_mem>> -> memref<1x!tpu.dma_semaphore, #tpu.memory_space<semaphore_mem>>
    %21 = tpu.memref_squeeze %20 : memref<1x!tpu.dma_semaphore, #tpu.memory_space<semaphore_mem>> -> memref<!tpu.dma_semaphore, #tpu.memory_space<semaphore_mem>>
    tpu.enqueue_dma source(%18 : memref<1x32xf32, #tpu.memory_space<any>>) target(%19 : memref<1x32xf32, #tpu.memory_space<vmem>>) target_semaphore(%21 : memref<!tpu.dma_semaphore, #tpu.memory_space<semaphore_mem>>)
    %c3_i32 = arith.constant 3 : i32
    %22 = arith.addi %0, %c3_i32 : i32
    %23 = arith.index_cast %22 : i32 to index
    %24 = memref.load %arg1[%23] : memref<16xi32, #tpu.memory_space<smem>>
    %c3_i32_12 = arith.constant 3 : i32
    %c0_i32_13 = arith.constant 0 : i32
    %25 = tpu.memref_slice %arg3[%24, %c0_i32_13] : memref<64x32xf32, #tpu.memory_space<any>> -> memref<1x32xf32, #tpu.memory_space<any>>
    %c3_i32_14 = arith.constant 3 : i32
    %c0_i32_15 = arith.constant 0 : i32
    %26 = tpu.memref_slice %arg5[%c3_i32_14, %c0_i32_15] : memref<16x32xf32, #tpu.memory_space<vmem>> -> memref<1x32xf32, #tpu.memory_space<vmem>>
    %27 = tpu.memref_slice %arg6[%c3_i32_12] : memref<16x!tpu.dma_semaphore, #tpu.memory_space<semaphore_mem>> -> memref<1x!tpu.dma_semaphore, #tpu.memory_space<semaphore_mem>>
    %28 = tpu.memref_squeeze %27 : memref<1x!tpu.dma_semaphore, #tpu.memory_space<semaphore_mem>> -> memref<!tpu.dma_semaphore, #tpu.memory_space<semaphore_mem>>
    tpu.enqueue_dma source(%25 : memref<1x32xf32, #tpu.memory_space<any>>) target(%26 : memref<1x32xf32, #tpu.memory_space<vmem>>) target_semaphore(%28 : memref<!tpu.dma_semaphore, #tpu.memory_space<semaphore_mem>>)
    %c4_i32 = arith.constant 4 : i32
    %29 = arith.addi %0, %c4_i32 : i32
    %30 = arith.index_cast %29 : i32 to index
    %31 = memref.load %arg1[%30] : memref<16xi32, #tpu.memory_space<smem>>
    %c4_i32_16 = arith.constant 4 : i32
    %c0_i32_17 = arith.constant 0 : i32
    %32 = tpu.memref_slice %arg3[%31, %c0_i32_17] : memref<64x32xf32, #tpu.memory_space<any>> -> memref<1x32xf32, #tpu.memory_space<any>>
    %c4_i32_18 = arith.constant 4 : i32
    %c0_i32_19 = arith.constant 0 : i32
    %33 = tpu.memref_slice %arg5[%c4_i32_18, %c0_i32_19] : memref<16x32xf32, #tpu.memory_space<vmem>> -> memref<1x32xf32, #tpu.memory_space<vmem>>
    %34 = tpu.memref_slice %arg6[%c4_i32_16] : memref<16x!tpu.dma_semaphore, #tpu.memory_space<semaphore_mem>> -> memref<1x!tpu.dma_semaphore, #tpu.memory_space<semaphore_mem>>
    %35 = tpu.memref_squeeze %34 : memref<1x!tpu.dma_semaphore, #tpu.memory_space<semaphore_mem>> -> memref<!tpu.dma_semaphore, #tpu.memory_space<semaphore_mem>>
    tpu.enqueue_dma source(%32 : memref<1x32xf32, #tpu.memory_space<any>>) target(%33 : memref<1x32xf32, #tpu.memory_space<vmem>>) target_semaphore(%35 : memref<!tpu.dma_semaphore, #tpu.memory_space<semaphore_mem>>)
    %c5_i32 = arith.constant 5 : i32
    %36 = arith.addi %0, %c5_i32 : i32
    %37 = arith.index_cast %36 : i32 to index
    %38 = memref.load %arg1[%37] : memref<16xi32, #tpu.memory_space<smem>>
    %c5_i32_20 = arith.constant 5 : i32
    %c0_i32_21 = arith.constant 0 : i32
    %39 = tpu.memref_slice %arg3[%38, %c0_i32_21] : memref<64x32xf32, #tpu.memory_space<any>> -> memref<1x32xf32, #tpu.memory_space<any>>
    %c5_i32_22 = arith.constant 5 : i32
    %c0_i32_23 = arith.constant 0 : i32
    %40 = tpu.memref_slice %arg5[%c5_i32_22, %c0_i32_23] : memref<16x32xf32, #tpu.memory_space<vmem>> -> memref<1x32xf32, #tpu.memory_space<vmem>>
    %41 = tpu.memref_slice %arg6[%c5_i32_20] : memref<16x!tpu.dma_semaphore, #tpu.memory_space<semaphore_mem>> -> memref<1x!tpu.dma_semaphore, #tpu.memory_space<semaphore_mem>>
    %42 = tpu.memref_squeeze %41 : memref<1x!tpu.dma_semaphore, #tpu.memory_space<semaphore_mem>> -> memref<!tpu.dma_semaphore, #tpu.memory_space<semaphore_mem>>
    tpu.enqueue_dma source(%39 : memref<1x32xf32, #tpu.memory_space<any>>) target(%40 : memref<1x32xf32, #tpu.memory_space<vmem>>) target_semaphore(%42 : memref<!tpu.dma_semaphore, #tpu.memory_space<semaphore_mem>>)
    %c6_i32 = arith.constant 6 : i32
    %43 = arith.addi %0, %c6_i32 : i32
    %44 = arith.index_cast %43 : i32 to index
    %45 = memref.load %arg1[%44] : memref<16xi32, #tpu.memory_space<smem>>
    %c6_i32_24 = arith.constant 6 : i32
    %c0_i32_25 = arith.constant 0 : i32
    %46 = tpu.memref_slice %arg3[%45, %c0_i32_25] : memref<64x32xf32, #tpu.memory_space<any>> -> memref<1x32xf32, #tpu.memory_space<any>>
    %c6_i32_26 = arith.constant 6 : i32
    %c0_i32_27 = arith.constant 0 : i32
    %47 = tpu.memref_slice %arg5[%c6_i32_26, %c0_i32_27] : memref<16x32xf32, #tpu.memory_space<vmem>> -> memref<1x32xf32, #tpu.memory_space<vmem>>
    %48 = tpu.memref_slice %arg6[%c6_i32_24] : memref<16x!tpu.dma_semaphore, #tpu.memory_space<semaphore_mem>> -> memref<1x!tpu.dma_semaphore, #tpu.memory_space<semaphore_mem>>
    %49 = tpu.memref_squeeze %48 : memref<1x!tpu.dma_semaphore, #tpu.memory_space<semaphore_mem>> -> memref<!tpu.dma_semaphore, #tpu.memory_space<semaphore_mem>>
    tpu.enqueue_dma source(%46 : memref<1x32xf32, #tpu.memory_space<any>>) target(%47 : memref<1x32xf32, #tpu.memory_space<vmem>>) target_semaphore(%49 : memref<!tpu.dma_semaphore, #tpu.memory_space<semaphore_mem>>)
    %c7_i32 = arith.constant 7 : i32
    %50 = arith.addi %0, %c7_i32 : i32
    %51 = arith.index_cast %50 : i32 to index
    %52 = memref.load %arg1[%51] : memref<16xi32, #tpu.memory_space<smem>>
    %c7_i32_28 = arith.constant 7 : i32
    %c0_i32_29 = arith.constant 0 : i32
    %53 = tpu.memref_slice %arg3[%52, %c0_i32_29] : memref<64x32xf32, #tpu.memory_space<any>> -> memref<1x32xf32, #tpu.memory_space<any>>
    %c7_i32_30 = arith.constant 7 : i32
    %c0_i32_31 = arith.constant 0 : i32
    %54 = tpu.memref_slice %arg5[%c7_i32_30, %c0_i32_31] : memref<16x32xf32, #tpu.memory_space<vmem>> -> memref<1x32xf32, #tpu.memory_space<vmem>>
    %55 = tpu.memref_slice %arg6[%c7_i32_28] : memref<16x!tpu.dma_semaphore, #tpu.memory_space<semaphore_mem>> -> memref<1x!tpu.dma_semaphore, #tpu.memory_space<semaphore_mem>>
    %56 = tpu.memref_squeeze %55 : memref<1x!tpu.dma_semaphore, #tpu.memory_space<semaphore_mem>> -> memref<!tpu.dma_semaphore, #tpu.memory_space<semaphore_mem>>
    tpu.enqueue_dma source(%53 : memref<1x32xf32, #tpu.memory_space<any>>) target(%54 : memref<1x32xf32, #tpu.memory_space<vmem>>) target_semaphore(%56 : memref<!tpu.dma_semaphore, #tpu.memory_space<semaphore_mem>>)
    %c8_i32 = arith.constant 8 : i32
    %57 = arith.addi %0, %c8_i32 : i32
    %58 = arith.index_cast %57 : i32 to index
    %59 = memref.load %arg1[%58] : memref<16xi32, #tpu.memory_space<smem>>
    %c8_i32_32 = arith.constant 8 : i32
    %c0_i32_33 = arith.constant 0 : i32
    %60 = tpu.memref_slice %arg3[%59, %c0_i32_33] : memref<64x32xf32, #tpu.memory_space<any>> -> memref<1x32xf32, #tpu.memory_space<any>>
    %c8_i32_34 = arith.constant 8 : i32
    %c0_i32_35 = arith.constant 0 : i32
    %61 = tpu.memref_slice %arg5[%c8_i32_34, %c0_i32_35] : memref<16x32xf32, #tpu.memory_space<vmem>> -> memref<1x32xf32, #tpu.memory_space<vmem>>
    %62 = tpu.memref_slice %arg6[%c8_i32_32] : memref<16x!tpu.dma_semaphore, #tpu.memory_space<semaphore_mem>> -> memref<1x!tpu.dma_semaphore, #tpu.memory_space<semaphore_mem>>
    %63 = tpu.memref_squeeze %62 : memref<1x!tpu.dma_semaphore, #tpu.memory_space<semaphore_mem>> -> memref<!tpu.dma_semaphore, #tpu.memory_space<semaphore_mem>>
    tpu.enqueue_dma source(%60 : memref<1x32xf32, #tpu.memory_space<any>>) target(%61 : memref<1x32xf32, #tpu.memory_space<vmem>>) target_semaphore(%63 : memref<!tpu.dma_semaphore, #tpu.memory_space<semaphore_mem>>)
    %c9_i32 = arith.constant 9 : i32
    %64 = arith.addi %0, %c9_i32 : i32
    %65 = arith.index_cast %64 : i32 to index
    %66 = memref.load %arg1[%65] : memref<16xi32, #tpu.memory_space<smem>>
    %c9_i32_36 = arith.constant 9 : i32
    %c0_i32_37 = arith.constant 0 : i32
    %67 = tpu.memref_slice %arg3[%66, %c0_i32_37] : memref<64x32xf32, #tpu.memory_space<any>> -> memref<1x32xf32, #tpu.memory_space<any>>
    %c9_i32_38 = arith.constant 9 : i32
    %c0_i32_39 = arith.constant 0 : i32
    %68 = tpu.memref_slice %arg5[%c9_i32_38, %c0_i32_39] : memref<16x32xf32, #tpu.memory_space<vmem>> -> memref<1x32xf32, #tpu.memory_space<vmem>>
    %69 = tpu.memref_slice %arg6[%c9_i32_36] : memref<16x!tpu.dma_semaphore, #tpu.memory_space<semaphore_mem>> -> memref<1x!tpu.dma_semaphore, #tpu.memory_space<semaphore_mem>>
    %70 = tpu.memref_squeeze %69 : memref<1x!tpu.dma_semaphore, #tpu.memory_space<semaphore_mem>> -> memref<!tpu.dma_semaphore, #tpu.memory_space<semaphore_mem>>
    tpu.enqueue_dma source(%67 : memref<1x32xf32, #tpu.memory_space<any>>) target(%68 : memref<1x32xf32, #tpu.memory_space<vmem>>) target_semaphore(%70 : memref<!tpu.dma_semaphore, #tpu.memory_space<semaphore_mem>>)
    %c10_i32 = arith.constant 10 : i32
    %71 = arith.addi %0, %c10_i32 : i32
    %72 = arith.index_cast %71 : i32 to index
    %73 = memref.load %arg1[%72] : memref<16xi32, #tpu.memory_space<smem>>
    %c10_i32_40 = arith.constant 10 : i32
    %c0_i32_41 = arith.constant 0 : i32
    %74 = tpu.memref_slice %arg3[%73, %c0_i32_41] : memref<64x32xf32, #tpu.memory_space<any>> -> memref<1x32xf32, #tpu.memory_space<any>>
    %c10_i32_42 = arith.constant 10 : i32
    %c0_i32_43 = arith.constant 0 : i32
    %75 = tpu.memref_slice %arg5[%c10_i32_42, %c0_i32_43] : memref<16x32xf32, #tpu.memory_space<vmem>> -> memref<1x32xf32, #tpu.memory_space<vmem>>
    %76 = tpu.memref_slice %arg6[%c10_i32_40] : memref<16x!tpu.dma_semaphore, #tpu.memory_space<semaphore_mem>> -> memref<1x!tpu.dma_semaphore, #tpu.memory_space<semaphore_mem>>
    %77 = tpu.memref_squeeze %76 : memref<1x!tpu.dma_semaphore, #tpu.memory_space<semaphore_mem>> -> memref<!tpu.dma_semaphore, #tpu.memory_space<semaphore_mem>>
    tpu.enqueue_dma source(%74 : memref<1x32xf32, #tpu.memory_space<any>>) target(%75 : memref<1x32xf32, #tpu.memory_space<vmem>>) target_semaphore(%77 : memref<!tpu.dma_semaphore, #tpu.memory_space<semaphore_mem>>)
    %c11_i32 = arith.constant 11 : i32
    %78 = arith.addi %0, %c11_i32 : i32
    %79 = arith.index_cast %78 : i32 to index
    %80 = memref.load %arg1[%79] : memref<16xi32, #tpu.memory_space<smem>>
    %c11_i32_44 = arith.constant 11 : i32
    %c0_i32_45 = arith.constant 0 : i32
    %81 = tpu.memref_slice %arg3[%80, %c0_i32_45] : memref<64x32xf32, #tpu.memory_space<any>> -> memref<1x32xf32, #tpu.memory_space<any>>
    %c11_i32_46 = arith.constant 11 : i32
    %c0_i32_47 = arith.constant 0 : i32
    %82 = tpu.memref_slice %arg5[%c11_i32_46, %c0_i32_47] : memref<16x32xf32, #tpu.memory_space<vmem>> -> memref<1x32xf32, #tpu.memory_space<vmem>>
    %83 = tpu.memref_slice %arg6[%c11_i32_44] : memref<16x!tpu.dma_semaphore, #tpu.memory_space<semaphore_mem>> -> memref<1x!tpu.dma_semaphore, #tpu.memory_space<semaphore_mem>>
    %84 = tpu.memref_squeeze %83 : memref<1x!tpu.dma_semaphore, #tpu.memory_space<semaphore_mem>> -> memref<!tpu.dma_semaphore, #tpu.memory_space<semaphore_mem>>
    tpu.enqueue_dma source(%81 : memref<1x32xf32, #tpu.memory_space<any>>) target(%82 : memref<1x32xf32, #tpu.memory_space<vmem>>) target_semaphore(%84 : memref<!tpu.dma_semaphore, #tpu.memory_space<semaphore_mem>>)
    %c12_i32 = arith.constant 12 : i32
    %85 = arith.addi %0, %c12_i32 : i32
    %86 = arith.index_cast %85 : i32 to index
    %87 = memref.load %arg1[%86] : memref<16xi32, #tpu.memory_space<smem>>
    %c12_i32_48 = arith.constant 12 : i32
    %c0_i32_49 = arith.constant 0 : i32
    %88 = tpu.memref_slice %arg3[%87, %c0_i32_49] : memref<64x32xf32, #tpu.memory_space<any>> -> memref<1x32xf32, #tpu.memory_space<any>>
    %c12_i32_50 = arith.constant 12 : i32
    %c0_i32_51 = arith.constant 0 : i32
    %89 = tpu.memref_slice %arg5[%c12_i32_50, %c0_i32_51] : memref<16x32xf32, #tpu.memory_space<vmem>> -> memref<1x32xf32, #tpu.memory_space<vmem>>
    %90 = tpu.memref_slice %arg6[%c12_i32_48] : memref<16x!tpu.dma_semaphore, #tpu.memory_space<semaphore_mem>> -> memref<1x!tpu.dma_semaphore, #tpu.memory_space<semaphore_mem>>
    %91 = tpu.memref_squeeze %90 : memref<1x!tpu.dma_semaphore, #tpu.memory_space<semaphore_mem>> -> memref<!tpu.dma_semaphore, #tpu.memory_space<semaphore_mem>>
    tpu.enqueue_dma source(%88 : memref<1x32xf32, #tpu.memory_space<any>>) target(%89 : memref<1x32xf32, #tpu.memory_space<vmem>>) target_semaphore(%91 : memref<!tpu.dma_semaphore, #tpu.memory_space<semaphore_mem>>)
    %c13_i32 = arith.constant 13 : i32
    %92 = arith.addi %0, %c13_i32 : i32
    %93 = arith.index_cast %92 : i32 to index
    %94 = memref.load %arg1[%93] : memref<16xi32, #tpu.memory_space<smem>>
    %c13_i32_52 = arith.constant 13 : i32
    %c0_i32_53 = arith.constant 0 : i32
    %95 = tpu.memref_slice %arg3[%94, %c0_i32_53] : memref<64x32xf32, #tpu.memory_space<any>> -> memref<1x32xf32, #tpu.memory_space<any>>
    %c13_i32_54 = arith.constant 13 : i32
    %c0_i32_55 = arith.constant 0 : i32
    %96 = tpu.memref_slice %arg5[%c13_i32_54, %c0_i32_55] : memref<16x32xf32, #tpu.memory_space<vmem>> -> memref<1x32xf32, #tpu.memory_space<vmem>>
    %97 = tpu.memref_slice %arg6[%c13_i32_52] : memref<16x!tpu.dma_semaphore, #tpu.memory_space<semaphore_mem>> -> memref<1x!tpu.dma_semaphore, #tpu.memory_space<semaphore_mem>>
    %98 = tpu.memref_squeeze %97 : memref<1x!tpu.dma_semaphore, #tpu.memory_space<semaphore_mem>> -> memref<!tpu.dma_semaphore, #tpu.memory_space<semaphore_mem>>
    tpu.enqueue_dma source(%95 : memref<1x32xf32, #tpu.memory_space<any>>) target(%96 : memref<1x32xf32, #tpu.memory_space<vmem>>) target_semaphore(%98 : memref<!tpu.dma_semaphore, #tpu.memory_space<semaphore_mem>>)
    %c14_i32 = arith.constant 14 : i32
    %99 = arith.addi %0, %c14_i32 : i32
    %100 = arith.index_cast %99 : i32 to index
    %101 = memref.load %arg1[%100] : memref<16xi32, #tpu.memory_space<smem>>
    %c14_i32_56 = arith.constant 14 : i32
    %c0_i32_57 = arith.constant 0 : i32
    %102 = tpu.memref_slice %arg3[%101, %c0_i32_57] : memref<64x32xf32, #tpu.memory_space<any>> -> memref<1x32xf32, #tpu.memory_space<any>>
    %c14_i32_58 = arith.constant 14 : i32
    %c0_i32_59 = arith.constant 0 : i32
    %103 = tpu.memref_slice %arg5[%c14_i32_58, %c0_i32_59] : memref<16x32xf32, #tpu.memory_space<vmem>> -> memref<1x32xf32, #tpu.memory_space<vmem>>
    %104 = tpu.memref_slice %arg6[%c14_i32_56] : memref<16x!tpu.dma_semaphore, #tpu.memory_space<semaphore_mem>> -> memref<1x!tpu.dma_semaphore, #tpu.memory_space<semaphore_mem>>
    %105 = tpu.memref_squeeze %104 : memref<1x!tpu.dma_semaphore, #tpu.memory_space<semaphore_mem>> -> memref<!tpu.dma_semaphore, #tpu.memory_space<semaphore_mem>>
    tpu.enqueue_dma source(%102 : memref<1x32xf32, #tpu.memory_space<any>>) target(%103 : memref<1x32xf32, #tpu.memory_space<vmem>>) target_semaphore(%105 : memref<!tpu.dma_semaphore, #tpu.memory_space<semaphore_mem>>)
    %c15_i32 = arith.constant 15 : i32
    %106 = arith.addi %0, %c15_i32 : i32
    %107 = arith.index_cast %106 : i32 to index
    %108 = memref.load %arg1[%107] : memref<16xi32, #tpu.memory_space<smem>>
    %c15_i32_60 = arith.constant 15 : i32
    %c0_i32_61 = arith.constant 0 : i32
    %109 = tpu.memref_slice %arg3[%108, %c0_i32_61] : memref<64x32xf32, #tpu.memory_space<any>> -> memref<1x32xf32, #tpu.memory_space<any>>
    %c15_i32_62 = arith.constant 15 : i32
    %c0_i32_63 = arith.constant 0 : i32
    %110 = tpu.memref_slice %arg5[%c15_i32_62, %c0_i32_63] : memref<16x32xf32, #tpu.memory_space<vmem>> -> memref<1x32xf32, #tpu.memory_space<vmem>>
    %111 = tpu.memref_slice %arg6[%c15_i32_60] : memref<16x!tpu.dma_semaphore, #tpu.memory_space<semaphore_mem>> -> memref<1x!tpu.dma_semaphore, #tpu.memory_space<semaphore_mem>>
    %112 = tpu.memref_squeeze %111 : memref<1x!tpu.dma_semaphore, #tpu.memory_space<semaphore_mem>> -> memref<!tpu.dma_semaphore, #tpu.memory_space<semaphore_mem>>
    tpu.enqueue_dma source(%109 : memref<1x32xf32, #tpu.memory_space<any>>) target(%110 : memref<1x32xf32, #tpu.memory_space<vmem>>) target_semaphore(%112 : memref<!tpu.dma_semaphore, #tpu.memory_space<semaphore_mem>>)
    %c0_i32_64 = arith.constant 0 : i32
    %c0_i32_65 = arith.constant 0 : i32
    %113 = tpu.memref_slice %arg3[%3, %c0_i32_65] : memref<64x32xf32, #tpu.memory_space<any>> -> memref<1x32xf32, #tpu.memory_space<any>>
    %c0_i32_66 = arith.constant 0 : i32
    %c0_i32_67 = arith.constant 0 : i32
    %114 = tpu.memref_slice %arg5[%c0_i32_66, %c0_i32_67] : memref<16x32xf32, #tpu.memory_space<vmem>> -> memref<1x32xf32, #tpu.memory_space<vmem>>
    %115 = tpu.memref_slice %arg6[%c0_i32_64] : memref<16x!tpu.dma_semaphore, #tpu.memory_space<semaphore_mem>> -> memref<1x!tpu.dma_semaphore, #tpu.memory_space<semaphore_mem>>
    %116 = tpu.memref_squeeze %115 : memref<1x!tpu.dma_semaphore, #tpu.memory_space<semaphore_mem>> -> memref<!tpu.dma_semaphore, #tpu.memory_space<semaphore_mem>>
    tpu.wait_dma2 semaphore(%116 : memref<!tpu.dma_semaphore, #tpu.memory_space<semaphore_mem>>) src(%113 : memref<1x32xf32, #tpu.memory_space<any>>) dst(%114 : memref<1x32xf32, #tpu.memory_space<vmem>>)
    %c1_i32_68 = arith.constant 1 : i32
    %c0_i32_69 = arith.constant 0 : i32
    %117 = tpu.memref_slice %arg3[%10, %c0_i32_69] : memref<64x32xf32, #tpu.memory_space<any>> -> memref<1x32xf32, #tpu.memory_space<any>>
    %c1_i32_70 = arith.constant 1 : i32
    %c0_i32_71 = arith.constant 0 : i32
    %118 = tpu.memref_slice %arg5[%c1_i32_70, %c0_i32_71] : memref<16x32xf32, #tpu.memory_space<vmem>> -> memref<1x32xf32, #tpu.memory_space<vmem>>
    %119 = tpu.memref_slice %arg6[%c1_i32_68] : memref<16x!tpu.dma_semaphore, #tpu.memory_space<semaphore_mem>> -> memref<1x!tpu.dma_semaphore, #tpu.memory_space<semaphore_mem>>
    %120 = tpu.memref_squeeze %119 : memref<1x!tpu.dma_semaphore, #tpu.memory_space<semaphore_mem>> -> memref<!tpu.dma_semaphore, #tpu.memory_space<semaphore_mem>>
    tpu.wait_dma2 semaphore(%120 : memref<!tpu.dma_semaphore, #tpu.memory_space<semaphore_mem>>) src(%117 : memref<1x32xf32, #tpu.memory_space<any>>) dst(%118 : memref<1x32xf32, #tpu.memory_space<vmem>>)
    %c2_i32_72 = arith.constant 2 : i32
    %c0_i32_73 = arith.constant 0 : i32
    %121 = tpu.memref_slice %arg3[%17, %c0_i32_73] : memref<64x32xf32, #tpu.memory_space<any>> -> memref<1x32xf32, #tpu.memory_space<any>>
    %c2_i32_74 = arith.constant 2 : i32
    %c0_i32_75 = arith.constant 0 : i32
    %122 = tpu.memref_slice %arg5[%c2_i32_74, %c0_i32_75] : memref<16x32xf32, #tpu.memory_space<vmem>> -> memref<1x32xf32, #tpu.memory_space<vmem>>
    %123 = tpu.memref_slice %arg6[%c2_i32_72] : memref<16x!tpu.dma_semaphore, #tpu.memory_space<semaphore_mem>> -> memref<1x!tpu.dma_semaphore, #tpu.memory_space<semaphore_mem>>
    %124 = tpu.memref_squeeze %123 : memref<1x!tpu.dma_semaphore, #tpu.memory_space<semaphore_mem>> -> memref<!tpu.dma_semaphore, #tpu.memory_space<semaphore_mem>>
    tpu.wait_dma2 semaphore(%124 : memref<!tpu.dma_semaphore, #tpu.memory_space<semaphore_mem>>) src(%121 : memref<1x32xf32, #tpu.memory_space<any>>) dst(%122 : memref<1x32xf32, #tpu.memory_space<vmem>>)
    %c3_i32_76 = arith.constant 3 : i32
    %c0_i32_77 = arith.constant 0 : i32
    %125 = tpu.memref_slice %arg3[%24, %c0_i32_77] : memref<64x32xf32, #tpu.memory_space<any>> -> memref<1x32xf32, #tpu.memory_space<any>>
    %c3_i32_78 = arith.constant 3 : i32
    %c0_i32_79 = arith.constant 0 : i32
    %126 = tpu.memref_slice %arg5[%c3_i32_78, %c0_i32_79] : memref<16x32xf32, #tpu.memory_space<vmem>> -> memref<1x32xf32, #tpu.memory_space<vmem>>
    %127 = tpu.memref_slice %arg6[%c3_i32_76] : memref<16x!tpu.dma_semaphore, #tpu.memory_space<semaphore_mem>> -> memref<1x!tpu.dma_semaphore, #tpu.memory_space<semaphore_mem>>
    %128 = tpu.memref_squeeze %127 : memref<1x!tpu.dma_semaphore, #tpu.memory_space<semaphore_mem>> -> memref<!tpu.dma_semaphore, #tpu.memory_space<semaphore_mem>>
    tpu.wait_dma2 semaphore(%128 : memref<!tpu.dma_semaphore, #tpu.memory_space<semaphore_mem>>) src(%125 : memref<1x32xf32, #tpu.memory_space<any>>) dst(%126 : memref<1x32xf32, #tpu.memory_space<vmem>>)
    %c4_i32_80 = arith.constant 4 : i32
    %c0_i32_81 = arith.constant 0 : i32
    %129 = tpu.memref_slice %arg3[%31, %c0_i32_81] : memref<64x32xf32, #tpu.memory_space<any>> -> memref<1x32xf32, #tpu.memory_space<any>>
    %c4_i32_82 = arith.constant 4 : i32
    %c0_i32_83 = arith.constant 0 : i32
    %130 = tpu.memref_slice %arg5[%c4_i32_82, %c0_i32_83] : memref<16x32xf32, #tpu.memory_space<vmem>> -> memref<1x32xf32, #tpu.memory_space<vmem>>
    %131 = tpu.memref_slice %arg6[%c4_i32_80] : memref<16x!tpu.dma_semaphore, #tpu.memory_space<semaphore_mem>> -> memref<1x!tpu.dma_semaphore, #tpu.memory_space<semaphore_mem>>
    %132 = tpu.memref_squeeze %131 : memref<1x!tpu.dma_semaphore, #tpu.memory_space<semaphore_mem>> -> memref<!tpu.dma_semaphore, #tpu.memory_space<semaphore_mem>>
    tpu.wait_dma2 semaphore(%132 : memref<!tpu.dma_semaphore, #tpu.memory_space<semaphore_mem>>) src(%129 : memref<1x32xf32, #tpu.memory_space<any>>) dst(%130 : memref<1x32xf32, #tpu.memory_space<vmem>>)
    %c5_i32_84 = arith.constant 5 : i32
    %c0_i32_85 = arith.constant 0 : i32
    %133 = tpu.memref_slice %arg3[%38, %c0_i32_85] : memref<64x32xf32, #tpu.memory_space<any>> -> memref<1x32xf32, #tpu.memory_space<any>>
    %c5_i32_86 = arith.constant 5 : i32
    %c0_i32_87 = arith.constant 0 : i32
    %134 = tpu.memref_slice %arg5[%c5_i32_86, %c0_i32_87] : memref<16x32xf32, #tpu.memory_space<vmem>> -> memref<1x32xf32, #tpu.memory_space<vmem>>
    %135 = tpu.memref_slice %arg6[%c5_i32_84] : memref<16x!tpu.dma_semaphore, #tpu.memory_space<semaphore_mem>> -> memref<1x!tpu.dma_semaphore, #tpu.memory_space<semaphore_mem>>
    %136 = tpu.memref_squeeze %135 : memref<1x!tpu.dma_semaphore, #tpu.memory_space<semaphore_mem>> -> memref<!tpu.dma_semaphore, #tpu.memory_space<semaphore_mem>>
    tpu.wait_dma2 semaphore(%136 : memref<!tpu.dma_semaphore, #tpu.memory_space<semaphore_mem>>) src(%133 : memref<1x32xf32, #tpu.memory_space<any>>) dst(%134 : memref<1x32xf32, #tpu.memory_space<vmem>>)
    %c6_i32_88 = arith.constant 6 : i32
    %c0_i32_89 = arith.constant 0 : i32
    %137 = tpu.memref_slice %arg3[%45, %c0_i32_89] : memref<64x32xf32, #tpu.memory_space<any>> -> memref<1x32xf32, #tpu.memory_space<any>>
    %c6_i32_90 = arith.constant 6 : i32
    %c0_i32_91 = arith.constant 0 : i32
    %138 = tpu.memref_slice %arg5[%c6_i32_90, %c0_i32_91] : memref<16x32xf32, #tpu.memory_space<vmem>> -> memref<1x32xf32, #tpu.memory_space<vmem>>
    %139 = tpu.memref_slice %arg6[%c6_i32_88] : memref<16x!tpu.dma_semaphore, #tpu.memory_space<semaphore_mem>> -> memref<1x!tpu.dma_semaphore, #tpu.memory_space<semaphore_mem>>
    %140 = tpu.memref_squeeze %139 : memref<1x!tpu.dma_semaphore, #tpu.memory_space<semaphore_mem>> -> memref<!tpu.dma_semaphore, #tpu.memory_space<semaphore_mem>>
    tpu.wait_dma2 semaphore(%140 : memref<!tpu.dma_semaphore, #tpu.memory_space<semaphore_mem>>) src(%137 : memref<1x32xf32, #tpu.memory_space<any>>) dst(%138 : memref<1x32xf32, #tpu.memory_space<vmem>>)
    %c7_i32_92 = arith.constant 7 : i32
    %c0_i32_93 = arith.constant 0 : i32
    %141 = tpu.memref_slice %arg3[%52, %c0_i32_93] : memref<64x32xf32, #tpu.memory_space<any>> -> memref<1x32xf32, #tpu.memory_space<any>>
    %c7_i32_94 = arith.constant 7 : i32
    %c0_i32_95 = arith.constant 0 : i32
    %142 = tpu.memref_slice %arg5[%c7_i32_94, %c0_i32_95] : memref<16x32xf32, #tpu.memory_space<vmem>> -> memref<1x32xf32, #tpu.memory_space<vmem>>
    %143 = tpu.memref_slice %arg6[%c7_i32_92] : memref<16x!tpu.dma_semaphore, #tpu.memory_space<semaphore_mem>> -> memref<1x!tpu.dma_semaphore, #tpu.memory_space<semaphore_mem>>
    %144 = tpu.memref_squeeze %143 : memref<1x!tpu.dma_semaphore, #tpu.memory_space<semaphore_mem>> -> memref<!tpu.dma_semaphore, #tpu.memory_space<semaphore_mem>>
    tpu.wait_dma2 semaphore(%144 : memref<!tpu.dma_semaphore, #tpu.memory_space<semaphore_mem>>) src(%141 : memref<1x32xf32, #tpu.memory_space<any>>) dst(%142 : memref<1x32xf32, #tpu.memory_space<vmem>>)
    %c8_i32_96 = arith.constant 8 : i32
    %c0_i32_97 = arith.constant 0 : i32
    %145 = tpu.memref_slice %arg3[%59, %c0_i32_97] : memref<64x32xf32, #tpu.memory_space<any>> -> memref<1x32xf32, #tpu.memory_space<any>>
    %c8_i32_98 = arith.constant 8 : i32
    %c0_i32_99 = arith.constant 0 : i32
    %146 = tpu.memref_slice %arg5[%c8_i32_98, %c0_i32_99] : memref<16x32xf32, #tpu.memory_space<vmem>> -> memref<1x32xf32, #tpu.memory_space<vmem>>
    %147 = tpu.memref_slice %arg6[%c8_i32_96] : memref<16x!tpu.dma_semaphore, #tpu.memory_space<semaphore_mem>> -> memref<1x!tpu.dma_semaphore, #tpu.memory_space<semaphore_mem>>
    %148 = tpu.memref_squeeze %147 : memref<1x!tpu.dma_semaphore, #tpu.memory_space<semaphore_mem>> -> memref<!tpu.dma_semaphore, #tpu.memory_space<semaphore_mem>>
    tpu.wait_dma2 semaphore(%148 : memref<!tpu.dma_semaphore, #tpu.memory_space<semaphore_mem>>) src(%145 : memref<1x32xf32, #tpu.memory_space<any>>) dst(%146 : memref<1x32xf32, #tpu.memory_space<vmem>>)
    %c9_i32_100 = arith.constant 9 : i32
    %c0_i32_101 = arith.constant 0 : i32
    %149 = tpu.memref_slice %arg3[%66, %c0_i32_101] : memref<64x32xf32, #tpu.memory_space<any>> -> memref<1x32xf32, #tpu.memory_space<any>>
    %c9_i32_102 = arith.constant 9 : i32
    %c0_i32_103 = arith.constant 0 : i32
    %150 = tpu.memref_slice %arg5[%c9_i32_102, %c0_i32_103] : memref<16x32xf32, #tpu.memory_space<vmem>> -> memref<1x32xf32, #tpu.memory_space<vmem>>
    %151 = tpu.memref_slice %arg6[%c9_i32_100] : memref<16x!tpu.dma_semaphore, #tpu.memory_space<semaphore_mem>> -> memref<1x!tpu.dma_semaphore, #tpu.memory_space<semaphore_mem>>
    %152 = tpu.memref_squeeze %151 : memref<1x!tpu.dma_semaphore, #tpu.memory_space<semaphore_mem>> -> memref<!tpu.dma_semaphore, #tpu.memory_space<semaphore_mem>>
    tpu.wait_dma2 semaphore(%152 : memref<!tpu.dma_semaphore, #tpu.memory_space<semaphore_mem>>) src(%149 : memref<1x32xf32, #tpu.memory_space<any>>) dst(%150 : memref<1x32xf32, #tpu.memory_space<vmem>>)
    %c10_i32_104 = arith.constant 10 : i32
    %c0_i32_105 = arith.constant 0 : i32
    %153 = tpu.memref_slice %arg3[%73, %c0_i32_105] : memref<64x32xf32, #tpu.memory_space<any>> -> memref<1x32xf32, #tpu.memory_space<any>>
    %c10_i32_106 = arith.constant 10 : i32
    %c0_i32_107 = arith.constant 0 : i32
    %154 = tpu.memref_slice %arg5[%c10_i32_106, %c0_i32_107] : memref<16x32xf32, #tpu.memory_space<vmem>> -> memref<1x32xf32, #tpu.memory_space<vmem>>
    %155 = tpu.memref_slice %arg6[%c10_i32_104] : memref<16x!tpu.dma_semaphore, #tpu.memory_space<semaphore_mem>> -> memref<1x!tpu.dma_semaphore, #tpu.memory_space<semaphore_mem>>
    %156 = tpu.memref_squeeze %155 : memref<1x!tpu.dma_semaphore, #tpu.memory_space<semaphore_mem>> -> memref<!tpu.dma_semaphore, #tpu.memory_space<semaphore_mem>>
    tpu.wait_dma2 semaphore(%156 : memref<!tpu.dma_semaphore, #tpu.memory_space<semaphore_mem>>) src(%153 : memref<1x32xf32, #tpu.memory_space<any>>) dst(%154 : memref<1x32xf32, #tpu.memory_space<vmem>>)
    %c11_i32_108 = arith.constant 11 : i32
    %c0_i32_109 = arith.constant 0 : i32
    %157 = tpu.memref_slice %arg3[%80, %c0_i32_109] : memref<64x32xf32, #tpu.memory_space<any>> -> memref<1x32xf32, #tpu.memory_space<any>>
    %c11_i32_110 = arith.constant 11 : i32
    %c0_i32_111 = arith.constant 0 : i32
    %158 = tpu.memref_slice %arg5[%c11_i32_110, %c0_i32_111] : memref<16x32xf32, #tpu.memory_space<vmem>> -> memref<1x32xf32, #tpu.memory_space<vmem>>
    %159 = tpu.memref_slice %arg6[%c11_i32_108] : memref<16x!tpu.dma_semaphore, #tpu.memory_space<semaphore_mem>> -> memref<1x!tpu.dma_semaphore, #tpu.memory_space<semaphore_mem>>
    %160 = tpu.memref_squeeze %159 : memref<1x!tpu.dma_semaphore, #tpu.memory_space<semaphore_mem>> -> memref<!tpu.dma_semaphore, #tpu.memory_space<semaphore_mem>>
    tpu.wait_dma2 semaphore(%160 : memref<!tpu.dma_semaphore, #tpu.memory_space<semaphore_mem>>) src(%157 : memref<1x32xf32, #tpu.memory_space<any>>) dst(%158 : memref<1x32xf32, #tpu.memory_space<vmem>>)
    %c12_i32_112 = arith.constant 12 : i32
    %c0_i32_113 = arith.constant 0 : i32
    %161 = tpu.memref_slice %arg3[%87, %c0_i32_113] : memref<64x32xf32, #tpu.memory_space<any>> -> memref<1x32xf32, #tpu.memory_space<any>>
    %c12_i32_114 = arith.constant 12 : i32
    %c0_i32_115 = arith.constant 0 : i32
    %162 = tpu.memref_slice %arg5[%c12_i32_114, %c0_i32_115] : memref<16x32xf32, #tpu.memory_space<vmem>> -> memref<1x32xf32, #tpu.memory_space<vmem>>
    %163 = tpu.memref_slice %arg6[%c12_i32_112] : memref<16x!tpu.dma_semaphore, #tpu.memory_space<semaphore_mem>> -> memref<1x!tpu.dma_semaphore, #tpu.memory_space<semaphore_mem>>
    %164 = tpu.memref_squeeze %163 : memref<1x!tpu.dma_semaphore, #tpu.memory_space<semaphore_mem>> -> memref<!tpu.dma_semaphore, #tpu.memory_space<semaphore_mem>>
    tpu.wait_dma2 semaphore(%164 : memref<!tpu.dma_semaphore, #tpu.memory_space<semaphore_mem>>) src(%161 : memref<1x32xf32, #tpu.memory_space<any>>) dst(%162 : memref<1x32xf32, #tpu.memory_space<vmem>>)
    %c13_i32_116 = arith.constant 13 : i32
    %c0_i32_117 = arith.constant 0 : i32
    %165 = tpu.memref_slice %arg3[%94, %c0_i32_117] : memref<64x32xf32, #tpu.memory_space<any>> -> memref<1x32xf32, #tpu.memory_space<any>>
    %c13_i32_118 = arith.constant 13 : i32
    %c0_i32_119 = arith.constant 0 : i32
    %166 = tpu.memref_slice %arg5[%c13_i32_118, %c0_i32_119] : memref<16x32xf32, #tpu.memory_space<vmem>> -> memref<1x32xf32, #tpu.memory_space<vmem>>
    %167 = tpu.memref_slice %arg6[%c13_i32_116] : memref<16x!tpu.dma_semaphore, #tpu.memory_space<semaphore_mem>> -> memref<1x!tpu.dma_semaphore, #tpu.memory_space<semaphore_mem>>
    %168 = tpu.memref_squeeze %167 : memref<1x!tpu.dma_semaphore, #tpu.memory_space<semaphore_mem>> -> memref<!tpu.dma_semaphore, #tpu.memory_space<semaphore_mem>>
    tpu.wait_dma2 semaphore(%168 : memref<!tpu.dma_semaphore, #tpu.memory_space<semaphore_mem>>) src(%165 : memref<1x32xf32, #tpu.memory_space<any>>) dst(%166 : memref<1x32xf32, #tpu.memory_space<vmem>>)
    %c14_i32_120 = arith.constant 14 : i32
    %c0_i32_121 = arith.constant 0 : i32
    %169 = tpu.memref_slice %arg3[%101, %c0_i32_121] : memref<64x32xf32, #tpu.memory_space<any>> -> memref<1x32xf32, #tpu.memory_space<any>>
    %c14_i32_122 = arith.constant 14 : i32
    %c0_i32_123 = arith.constant 0 : i32
    %170 = tpu.memref_slice %arg5[%c14_i32_122, %c0_i32_123] : memref<16x32xf32, #tpu.memory_space<vmem>> -> memref<1x32xf32, #tpu.memory_space<vmem>>
    %171 = tpu.memref_slice %arg6[%c14_i32_120] : memref<16x!tpu.dma_semaphore, #tpu.memory_space<semaphore_mem>> -> memref<1x!tpu.dma_semaphore, #tpu.memory_space<semaphore_mem>>
    %172 = tpu.memref_squeeze %171 : memref<1x!tpu.dma_semaphore, #tpu.memory_space<semaphore_mem>> -> memref<!tpu.dma_semaphore, #tpu.memory_space<semaphore_mem>>
    tpu.wait_dma2 semaphore(%172 : memref<!tpu.dma_semaphore, #tpu.memory_space<semaphore_mem>>) src(%169 : memref<1x32xf32, #tpu.memory_space<any>>) dst(%170 : memref<1x32xf32, #tpu.memory_space<vmem>>)
    %c15_i32_124 = arith.constant 15 : i32
    %c0_i32_125 = arith.constant 0 : i32
    %173 = tpu.memref_slice %arg3[%108, %c0_i32_125] : memref<64x32xf32, #tpu.memory_space<any>> -> memref<1x32xf32, #tpu.memory_space<any>>
    %c15_i32_126 = arith.constant 15 : i32
    %c0_i32_127 = arith.constant 0 : i32
    %174 = tpu.memref_slice %arg5[%c15_i32_126, %c0_i32_127] : memref<16x32xf32, #tpu.memory_space<vmem>> -> memref<1x32xf32, #tpu.memory_space<vmem>>
    %175 = tpu.memref_slice %arg6[%c15_i32_124] : memref<16x!tpu.dma_semaphore, #tpu.memory_space<semaphore_mem>> -> memref<1x!tpu.dma_semaphore, #tpu.memory_space<semaphore_mem>>
    %176 = tpu.memref_squeeze %175 : memref<1x!tpu.dma_semaphore, #tpu.memory_space<semaphore_mem>> -> memref<!tpu.dma_semaphore, #tpu.memory_space<semaphore_mem>>
    tpu.wait_dma2 semaphore(%176 : memref<!tpu.dma_semaphore, #tpu.memory_space<semaphore_mem>>) src(%173 : memref<1x32xf32, #tpu.memory_space<any>>) dst(%174 : memref<1x32xf32, #tpu.memory_space<vmem>>)
    %c0 = arith.constant 0 : index
    %c0_128 = arith.constant 0 : index
    %177 = vector.load %arg5[%c0, %c0_128] : memref<16x32xf32, #tpu.memory_space<vmem>>, vector<16x32xf32>
    %c0_129 = arith.constant 0 : index
    %c0_130 = arith.constant 0 : index
    %178 = vector.load %arg2[%c0_129, %c0_130] : memref<16x1xf32, #tpu.memory_space<vmem>>, vector<16x1xf32>
    %179 = vector.broadcast %178 : vector<16x1xf32> to vector<16x32xf32>
    %180 = arith.mulf %177, %179 : vector<16x32xf32>
    %c0_131 = arith.constant 0 : index
    %c0_132 = arith.constant 0 : index
    %181 = vector.load %arg4[%c0_131, %c0_132] : memref<16x32xf32, #tpu.memory_space<vmem>>, vector<16x32xf32>
    tpu.vector_store %arg4[%c0_131, %c0_132], %180 {strides = array<i32>} : memref<16x32xf32, #tpu.memory_space<vmem>>, vector<16x32xf32>,
    return
  }
  func.func @transform_0(%arg0: i32, %arg1: memref<16xi32, #tpu.memory_space<smem>>) -> (i32, i32) {
    %c0_i32 = arith.constant 0 : i32
    %c0_i32_0 = arith.constant 0 : i32
    return %arg0, %c0_i32 : i32, i32
  }
  func.func @transform_2(%arg0: i32, %arg1: memref<16xi32, #tpu.memory_space<smem>>) -> (i32, i32) {
    %c0_i32 = arith.constant 0 : i32
    %c0_i32_0 = arith.constant 0 : i32
    return %arg0, %c0_i32 : i32, i32
  }
}

</mosaic_0001>

<llo_original>
// kernel: word_encoder_forward.1
$region0: #{word_encoder_forward.1}
  #allocation0 [shape = 'u32[]', space=smem, size = 0x4, offset = 0x4, fixed_abs, tag = 'smem constant byte address 0x4 - core index']
  #allocation1 [shape = 'u32[72,128]{1,0:T(1,128)}', space=vmem, size = 0x9000, scoped, tag = 'internal scratch']
  #allocation2 [shape = 'f32[16,32]{1,0:T(8,128)}', space=vmem, size = 0x2000, scoped, tag = 'scratch operand']
  #allocation3 [shape = 's32[16]{0}', space=sflag, size = 0x40, scoped, tag = 'scratch operand']
  #allocation4 [shape = 's32[1]{0}', space=sflag, size = 0x4, scoped, tag = 'scoped memory for word_encoder_forward.1']
  #allocation5 [shape = 'u8[512]{0}', space=smem, size = 0x200, scoped, tag = 'prefetched SMEM operand 0']
  #allocation8 [shape = 's32[]', space=sflag, size = 0x4, offset = 0, fixed_abs, tag = 'sflag constant byte address 0x0 - dummy sync flag']
  #allocation9 [shape = 's32[]', space=sflag, size = 0x4, offset = 0, fixed_abs, tag = 'sflag constant byte address 0x0 - dummy sync flag']
  #allocation10 [shape = 's32[]', space=sflag, size = 0x4, offset = 0, fixed_abs, tag = 'sflag constant byte address 0x0 - dummy sync flag']
  #allocation11 [shape = 's32[]', space=sflag, size = 0x4, offset = 0, fixed_abs, tag = 'sflag constant byte address 0x0 - dummy sync flag']
  #allocation12 [shape = 's32[]', space=sflag, size = 0x4, offset = 0, fixed_abs, tag = 'sflag constant byte address 0x0 - dummy sync flag']
  #allocation13 [shape = 's32[]', space=sflag, size = 0x4, offset = 0, fixed_abs, tag = 'sflag constant byte address 0x0 - dummy sync flag']
  #allocation14 [shape = 's32[]', space=sflag, size = 0x4, offset = 0, fixed_abs, tag = 'sflag constant byte address 0x0 - dummy sync flag']
  #allocation15 [shape = 's32[]', space=sflag, size = 0x4, offset = 0, fixed_abs, tag = 'sflag constant byte address 0x0 - dummy sync flag']
  #allocation16 [shape = 's32[]', space=sflag, size = 0x4, offset = 0, fixed_abs, tag = 'sflag constant byte address 0x0 - dummy sync flag']
  #allocation17 [shape = 's32[]', space=sflag, size = 0x4, offset = 0, fixed_abs, tag = 'sflag constant byte address 0x0 - dummy sync flag']
  #allocation18 [shape = 's32[]', space=sflag, size = 0x4, offset = 0, fixed_abs, tag = 'sflag constant byte address 0x0 - dummy sync flag']
  #allocation19 [shape = 's32[]', space=sflag, size = 0x4, offset = 0, fixed_abs, tag = 'sflag constant byte address 0x0 - dummy sync flag']
  #allocation20 [shape = 's32[]', space=sflag, size = 0x4, offset = 0, fixed_abs, tag = 'sflag constant byte address 0x0 - dummy sync flag']
  #allocation21 [shape = 's32[]', space=sflag, size = 0x4, offset = 0, fixed_abs, tag = 'sflag constant byte address 0x0 - dummy sync flag']
  #allocation22 [shape = 's32[]', space=sflag, size = 0x4, offset = 0, fixed_abs, tag = 'sflag constant byte address 0x0 - dummy sync flag']
  #allocation23 [shape = 's32[]', space=sflag, size = 0x4, offset = 0, fixed_abs, tag = 'sflag constant byte address 0x0 - dummy sync flag']
  %s0 = inlined_call_operand.vmem [shape: s32[16], index: 0, kind: input, shape index: {}]
  %s1 = inlined_call_operand.vmem [shape: f32[16,1], index: 1, kind: input, shape index: {}]
  %s2 = inlined_call_operand.vmem [shape: f32[64,32], index: 2, kind: input, shape index: {}]
  %s3 = inlined_call_operand.hbm [shape: f32[16,32], index: 3, kind: output, shape index: {}]
  %s4 = sld [smem:[#allocation0]]
  $region494: #{word_encoder_forward.1} parent=0
    _
  %s6 = ssub.s32 1, %s4
  %s7 = scalar_select 0, %s6, %s4
  %s9 = sshll.u32 %s0, 4
  %s10 = int_to_ptr.vmem [resolvable:$true] %s9
  %12 = dma.vmem_to_smem %s10, 16, [#allocation5], [#allocation4]
  %14 = dma.done [#allocation4], 16
  %15 = sfence
  $region1: #{word_encoder_forward.1} parent=0
    #allocation6 [shape = 'u8[8192]{0}', space=vmem, size = 0x2000, scoped, tag = 'output window, operand 0, single buffered']
    #allocation7 [shape = 's32[1]{0}', space=sflag, size = 0x4, scoped, tag = 'scoped memory for word_encoder_forward.1']
    %16 = vsyncpa [#allocation7], 0
    // Predicated region
    $region2: #{word_encoder_forward.1} parent=1 // pred_check
      _
    $region3: #{word_encoder_forward.1} parent=1 // pred_check_branch
      %18 = sbr.rel (0) target = $region5
    $region4: #{word_encoder_forward.1} parent=1 // pred_region
      _
    $region5: #{word_encoder_forward.1} parent=1 // pred_fallthru
      _
    %s19 = smul.u32 0, 16
    %s20 = sld [smem:[#allocation5 + %s19]]
    %s21 = scalar_lea.vmem %s2, %s20
    // Predicated region
    $region6: #{word_encoder_forward.1} parent=1 // pred_check
      _
    $region7: #{word_encoder_forward.1} parent=1 // pred_check_branch
      %23 = sbr.rel target = $region9
    $region8: #{word_encoder_forward.1} parent=1 // pred_region
      // Predicated region
      $region21: #{word_encoder_forward.1} parent=8 // pred_check
        _
      $region22: #{word_encoder_forward.1} parent=8 // pred_check_branch
        %39 = sbr.rel (0) target = $region24
      $region23: #{word_encoder_forward.1} parent=8 // pred_region
        %s41 = ssub.s32 2, 1
        loop: start=0, step=1, limit=1
        $region25: #{word_encoder_forward.1} parent=23 // loop_pre_header
          _
        $region26: #{word_encoder_forward.1} parent=23 // loop_header
          %s43 = sphi 0, %s47
          %p44 = scmp.ge.s32.totalorder %s43, 1
          %s48 = sphi %s21, %s21
          %s49 = sphi [#allocation2], [#allocation2]
        $region27: #{word_encoder_forward.1} parent=23 // loop_header_branch
          %46 = sbr.rel (%p44) target = $region31
        $region28: #{word_encoder_forward.1} parent=23 // loop_body
          %v50 = vld [vmem:[%s48] sm:%s41]
          %51 = vst [vmem:[%s49] sm:%s41] %v50
        $region29: #{word_encoder_forward.1} parent=23 // loop_footer
          %s47 = sadd.s32 1, %s43
        $region30: #{word_encoder_forward.1} parent=23 // loop_footer_branch
          %42 = sbr.rel target = $region26
        $region31: #{word_encoder_forward.1} parent=23 // loop_exit
          _
      $region24: #{word_encoder_forward.1} parent=8 // pred_fallthru
        _
    $region9: #{word_encoder_forward.1} parent=1 // pred_fallthru
      _
    // Predicated region
    $region10: #{word_encoder_forward.1} parent=1 // pred_check
      _
    $region11: #{word_encoder_forward.1} parent=1 // pred_check_branch
      %25 = sbr.rel (0) target = $region13
    $region12: #{word_encoder_forward.1} parent=1 // pred_region
      %s27 = ssub.s32 2, 1
      loop: start=0, step=1, limit=1
      $region14: #{word_encoder_forward.1} parent=12 // loop_pre_header
        _
      $region15: #{word_encoder_forward.1} parent=12 // loop_header
        %s29 = sphi 0, %s33
        %p30 = scmp.ge.s32.totalorder %s29, 1
        %s34 = sphi %s21, %s21
        %s35 = sphi [#allocation2], [#allocation2]
      $region16: #{word_encoder_forward.1} parent=12 // loop_header_branch
        %32 = sbr.rel (%p30) target = $region20
      $region17: #{word_encoder_forward.1} parent=12 // loop_body
        %v36 = vld [vmem:[%s34] sm:%s27]
        %37 = vst [vmem:[%s35] sm:%s27] %v36
      $region18: #{word_encoder_forward.1} parent=12 // loop_footer
        %s33 = sadd.s32 1, %s29
      $region19: #{word_encoder_forward.1} parent=12 // loop_footer_branch
        %28 = sbr.rel target = $region15
      $region20: #{word_encoder_forward.1} parent=12 // loop_exit
        _
    $region13: #{word_encoder_forward.1} parent=1 // pred_fallthru
      _
    // Predicated region
    $region32: #{word_encoder_forward.1} parent=1 // pred_check
      _
    $region33: #{word_encoder_forward.1} parent=1 // pred_check_branch
      %54 = sbr.rel (0) target = $region35
    $region34: #{word_encoder_forward.1} parent=1 // pred_region
      %55 = vsyncadd [#allocation3], 16
    $region35: #{word_encoder_forward.1} parent=1 // pred_fallthru
      _
    %s56 = sadd.s32 %s19, 1
    %s57 = sld [smem:[#allocation5 + %s56]]
    %s58 = scalar_lea.vmem %s2, %s57
    %s59 = scalar_lea.vmem [#allocation2], 1
    %s60 = scalar_lea.sflag [#allocation3], 1
    // Predicated region
    $region36: #{word_encoder_forward.1} parent=1 // pred_check
      _
    $region37: #{word_encoder_forward.1} parent=1 // pred_check_branch
      %62 = sbr.rel target = $region39
    $region38: #{word_encoder_forward.1} parent=1 // pred_region
      // Predicated region
      $region51: #{word_encoder_forward.1} parent=38 // pred_check
        _
      $region52: #{word_encoder_forward.1} parent=38 // pred_check_branch
        %78 = sbr.rel (0) target = $region54
      $region53: #{word_encoder_forward.1} parent=38 // pred_region
        %s80 = ssub.s32 2, 1
        loop: start=0, step=1, limit=1
        $region55: #{word_encoder_forward.1} parent=53 // loop_pre_header
          _
        $region56: #{word_encoder_forward.1} parent=53 // loop_header
          %s82 = sphi 0, %s86
          %p83 = scmp.ge.s32.totalorder %s82, 1
          %s87 = sphi %s58, %s58
          %s88 = sphi %s59, %s59
        $region57: #{word_encoder_forward.1} parent=53 // loop_header_branch
          %85 = sbr.rel (%p83) target = $region61
        $region58: #{word_encoder_forward.1} parent=53 // loop_body
          %v89 = vld [vmem:[%s87] sm:%s80]
          %90 = vst [vmem:[%s88] sm:%s80] %v89
        $region59: #{word_encoder_forward.1} parent=53 // loop_footer
          %s86 = sadd.s32 1, %s82
        $region60: #{word_encoder_forward.1} parent=53 // loop_footer_branch
          %81 = sbr.rel target = $region56
        $region61: #{word_encoder_forward.1} parent=53 // loop_exit
          _
      $region54: #{word_encoder_forward.1} parent=38 // pred_fallthru
        _
    $region39: #{word_encoder_forward.1} parent=1 // pred_fallthru
      _
    // Predicated region
    $region40: #{word_encoder_forward.1} parent=1 // pred_check
      _
    $region41: #{word_encoder_forward.1} parent=1 // pred_check_branch
      %64 = sbr.rel (0) target = $region43
    $region42: #{word_encoder_forward.1} parent=1 // pred_region
      %s66 = ssub.s32 2, 1
      loop: start=0, step=1, limit=1
      $region44: #{word_encoder_forward.1} parent=42 // loop_pre_header
        _
      $region45: #{word_encoder_forward.1} parent=42 // loop_header
        %s68 = sphi 0, %s72
        %p69 = scmp.ge.s32.totalorder %s68, 1
        %s73 = sphi %s58, %s58
        %s74 = sphi %s59, %s59
      $region46: #{word_encoder_forward.1} parent=42 // loop_header_branch
        %71 = sbr.rel (%p69) target = $region50
      $region47: #{word_encoder_forward.1} parent=42 // loop_body
        %v75 = vld [vmem:[%s73] sm:%s66]
        %76 = vst [vmem:[%s74] sm:%s66] %v75
      $region48: #{word_encoder_forward.1} parent=42 // loop_footer
        %s72 = sadd.s32 1, %s68
      $region49: #{word_encoder_forward.1} parent=42 // loop_footer_branch
        %67 = sbr.rel target = $region45
      $region50: #{word_encoder_forward.1} parent=42 // loop_exit
        _
    $region43: #{word_encoder_forward.1} parent=1 // pred_fallthru
      _
    // Predicated region
    $region62: #{word_encoder_forward.1} parent=1 // pred_check
      _
    $region63: #{word_encoder_forward.1} parent=1 // pred_check_branch
      %93 = sbr.rel (0) target = $region65
    $region64: #{word_encoder_forward.1} parent=1 // pred_region
      %94 = vsyncadd %s60, 16
    $region65: #{word_encoder_forward.1} parent=1 // pred_fallthru
      _
    %s95 = sadd.s32 %s19, 2
    %s96 = sld [smem:[#allocation5 + %s95]]
    %s97 = scalar_lea.vmem %s2, %s96
    %s98 = scalar_lea.vmem [#allocation2], 2
    %s99 = scalar_lea.sflag [#allocation3], 2
    // Predicated region
    $region66: #{word_encoder_forward.1} parent=1 // pred_check
      _
    $region67: #{word_encoder_forward.1} parent=1 // pred_check_branch
      %101 = sbr.rel target = $region69
    $region68: #{word_encoder_forward.1} parent=1 // pred_region
      // Predicated region
      $region81: #{word_encoder_forward.1} parent=68 // pred_check
        _
      $region82: #{word_encoder_forward.1} parent=68 // pred_check_branch
        %117 = sbr.rel (0) target = $region84
      $region83: #{word_encoder_forward.1} parent=68 // pred_region
        %s119 = ssub.s32 2, 1
        loop: start=0, step=1, limit=1
        $region85: #{word_encoder_forward.1} parent=83 // loop_pre_header
          _
        $region86: #{word_encoder_forward.1} parent=83 // loop_header
          %s121 = sphi 0, %s125
          %p122 = scmp.ge.s32.totalorder %s121, 1
          %s126 = sphi %s97, %s97
          %s127 = sphi %s98, %s98
        $region87: #{word_encoder_forward.1} parent=83 // loop_header_branch
          %124 = sbr.rel (%p122) target = $region91
        $region88: #{word_encoder_forward.1} parent=83 // loop_body
          %v128 = vld [vmem:[%s126] sm:%s119]
          %129 = vst [vmem:[%s127] sm:%s119] %v128
        $region89: #{word_encoder_forward.1} parent=83 // loop_footer
          %s125 = sadd.s32 1, %s121
        $region90: #{word_encoder_forward.1} parent=83 // loop_footer_branch
          %120 = sbr.rel target = $region86
        $region91: #{word_encoder_forward.1} parent=83 // loop_exit
          _
      $region84: #{word_encoder_forward.1} parent=68 // pred_fallthru
        _
    $region69: #{word_encoder_forward.1} parent=1 // pred_fallthru
      _
    // Predicated region
    $region70: #{word_encoder_forward.1} parent=1 // pred_check
      _
    $region71: #{word_encoder_forward.1} parent=1 // pred_check_branch
      %103 = sbr.rel (0) target = $region73
    $region72: #{word_encoder_forward.1} parent=1 // pred_region
      %s105 = ssub.s32 2, 1
      loop: start=0, step=1, limit=1
      $region74: #{word_encoder_forward.1} parent=72 // loop_pre_header
        _
      $region75: #{word_encoder_forward.1} parent=72 // loop_header
        %s107 = sphi 0, %s111
        %p108 = scmp.ge.s32.totalorder %s107, 1
        %s112 = sphi %s97, %s97
        %s113 = sphi %s98, %s98
      $region76: #{word_encoder_forward.1} parent=72 // loop_header_branch
        %110 = sbr.rel (%p108) target = $region80
      $region77: #{word_encoder_forward.1} parent=72 // loop_body
        %v114 = vld [vmem:[%s112] sm:%s105]
        %115 = vst [vmem:[%s113] sm:%s105] %v114
      $region78: #{word_encoder_forward.1} parent=72 // loop_footer
        %s111 = sadd.s32 1, %s107
      $region79: #{word_encoder_forward.1} parent=72 // loop_footer_branch
        %106 = sbr.rel target = $region75
      $region80: #{word_encoder_forward.1} parent=72 // loop_exit
        _
    $region73: #{word_encoder_forward.1} parent=1 // pred_fallthru
      _
    // Predicated region
    $region92: #{word_encoder_forward.1} parent=1 // pred_check
      _
    $region93: #{word_encoder_forward.1} parent=1 // pred_check_branch
      %132 = sbr.rel (0) target = $region95
    $region94: #{word_encoder_forward.1} parent=1 // pred_region
      %133 = vsyncadd %s99, 16
    $region95: #{word_encoder_forward.1} parent=1 // pred_fallthru
      _
    %s134 = sadd.s32 %s19, 3
    %s135 = sld [smem:[#allocation5 + %s134]]
    %s136 = scalar_lea.vmem %s2, %s135
    %s137 = scalar_lea.vmem [#allocation2], 3
    %s138 = scalar_lea.sflag [#allocation3], 3
    // Predicated region
    $region96: #{word_encoder_forward.1} parent=1 // pred_check
      _
    $region97: #{word_encoder_forward.1} parent=1 // pred_check_branch
      %140 = sbr.rel target = $region99
    $region98: #{word_encoder_forward.1} parent=1 // pred_region
      // Predicated region
      $region111: #{word_encoder_forward.1} parent=98 // pred_check
        _
      $region112: #{word_encoder_forward.1} parent=98 // pred_check_branch
        %156 = sbr.rel (0) target = $region114
      $region113: #{word_encoder_forward.1} parent=98 // pred_region
        %s158 = ssub.s32 2, 1
        loop: start=0, step=1, limit=1
        $region115: #{word_encoder_forward.1} parent=113 // loop_pre_header
          _
        $region116: #{word_encoder_forward.1} parent=113 // loop_header
          %s160 = sphi 0, %s164
          %p161 = scmp.ge.s32.totalorder %s160, 1
          %s165 = sphi %s136, %s136
          %s166 = sphi %s137, %s137
        $region117: #{word_encoder_forward.1} parent=113 // loop_header_branch
          %163 = sbr.rel (%p161) target = $region121
        $region118: #{word_encoder_forward.1} parent=113 // loop_body
          %v167 = vld [vmem:[%s165] sm:%s158]
          %168 = vst [vmem:[%s166] sm:%s158] %v167
        $region119: #{word_encoder_forward.1} parent=113 // loop_footer
          %s164 = sadd.s32 1, %s160
        $region120: #{word_encoder_forward.1} parent=113 // loop_footer_branch
          %159 = sbr.rel target = $region116
        $region121: #{word_encoder_forward.1} parent=113 // loop_exit
          _
      $region114: #{word_encoder_forward.1} parent=98 // pred_fallthru
        _
    $region99: #{word_encoder_forward.1} parent=1 // pred_fallthru
      _
    // Predicated region
    $region100: #{word_encoder_forward.1} parent=1 // pred_check
      _
    $region101: #{word_encoder_forward.1} parent=1 // pred_check_branch
      %142 = sbr.rel (0) target = $region103
    $region102: #{word_encoder_forward.1} parent=1 // pred_region
      %s144 = ssub.s32 2, 1
      loop: start=0, step=1, limit=1
      $region104: #{word_encoder_forward.1} parent=102 // loop_pre_header
        _
      $region105: #{word_encoder_forward.1} parent=102 // loop_header
        %s146 = sphi 0, %s150
        %p147 = scmp.ge.s32.totalorder %s146, 1
        %s151 = sphi %s136, %s136
        %s152 = sphi %s137, %s137
      $region106: #{word_encoder_forward.1} parent=102 // loop_header_branch
        %149 = sbr.rel (%p147) target = $region110
      $region107: #{word_encoder_forward.1} parent=102 // loop_body
        %v153 = vld [vmem:[%s151] sm:%s144]
        %154 = vst [vmem:[%s152] sm:%s144] %v153
      $region108: #{word_encoder_forward.1} parent=102 // loop_footer
        %s150 = sadd.s32 1, %s146
      $region109: #{word_encoder_forward.1} parent=102 // loop_footer_branch
        %145 = sbr.rel target = $region105
      $region110: #{word_encoder_forward.1} parent=102 // loop_exit
        _
    $region103: #{word_encoder_forward.1} parent=1 // pred_fallthru
      _
    // Predicated region
    $region122: #{word_encoder_forward.1} parent=1 // pred_check
      _
    $region123: #{word_encoder_forward.1} parent=1 // pred_check_branch
      %171 = sbr.rel (0) target = $region125
    $region124: #{word_encoder_forward.1} parent=1 // pred_region
      %172 = vsyncadd %s138, 16
    $region125: #{word_encoder_forward.1} parent=1 // pred_fallthru
      _
    %s173 = sadd.s32 %s19, 4
    %s174 = sld [smem:[#allocation5 + %s173]]
    %s175 = scalar_lea.vmem %s2, %s174
    %s176 = scalar_lea.vmem [#allocation2], 4
    %s177 = scalar_lea.sflag [#allocation3], 4
    // Predicated region
    $region126: #{word_encoder_forward.1} parent=1 // pred_check
      _
    $region127: #{word_encoder_forward.1} parent=1 // pred_check_branch
      %179 = sbr.rel target = $region129
    $region128: #{word_encoder_forward.1} parent=1 // pred_region
      // Predicated region
      $region141: #{word_encoder_forward.1} parent=128 // pred_check
        _
      $region142: #{word_encoder_forward.1} parent=128 // pred_check_branch
        %195 = sbr.rel (0) target = $region144
      $region143: #{word_encoder_forward.1} parent=128 // pred_region
        %s197 = ssub.s32 2, 1
        loop: start=0, step=1, limit=1
        $region145: #{word_encoder_forward.1} parent=143 // loop_pre_header
          _
        $region146: #{word_encoder_forward.1} parent=143 // loop_header
          %s199 = sphi 0, %s203
          %p200 = scmp.ge.s32.totalorder %s199, 1
          %s204 = sphi %s175, %s175
          %s205 = sphi %s176, %s176
        $region147: #{word_encoder_forward.1} parent=143 // loop_header_branch
          %202 = sbr.rel (%p200) target = $region151
        $region148: #{word_encoder_forward.1} parent=143 // loop_body
          %v206 = vld [vmem:[%s204] sm:%s197]
          %207 = vst [vmem:[%s205] sm:%s197] %v206
        $region149: #{word_encoder_forward.1} parent=143 // loop_footer
          %s203 = sadd.s32 1, %s199
        $region150: #{word_encoder_forward.1} parent=143 // loop_footer_branch
          %198 = sbr.rel target = $region146
        $region151: #{word_encoder_forward.1} parent=143 // loop_exit
          _
      $region144: #{word_encoder_forward.1} parent=128 // pred_fallthru
        _
    $region129: #{word_encoder_forward.1} parent=1 // pred_fallthru
      _
    // Predicated region
    $region130: #{word_encoder_forward.1} parent=1 // pred_check
      _
    $region131: #{word_encoder_forward.1} parent=1 // pred_check_branch
      %181 = sbr.rel (0) target = $region133
    $region132: #{word_encoder_forward.1} parent=1 // pred_region
      %s183 = ssub.s32 2, 1
      loop: start=0, step=1, limit=1
      $region134: #{word_encoder_forward.1} parent=132 // loop_pre_header
        _
      $region135: #{word_encoder_forward.1} parent=132 // loop_header
        %s185 = sphi 0, %s189
        %p186 = scmp.ge.s32.totalorder %s185, 1
        %s190 = sphi %s175, %s175
        %s191 = sphi %s176, %s176
      $region136: #{word_encoder_forward.1} parent=132 // loop_header_branch
        %188 = sbr.rel (%p186) target = $region140
      $region137: #{word_encoder_forward.1} parent=132 // loop_body
        %v192 = vld [vmem:[%s190] sm:%s183]
        %193 = vst [vmem:[%s191] sm:%s183] %v192
      $region138: #{word_encoder_forward.1} parent=132 // loop_footer
        %s189 = sadd.s32 1, %s185
      $region139: #{word_encoder_forward.1} parent=132 // loop_footer_branch
        %184 = sbr.rel target = $region135
      $region140: #{word_encoder_forward.1} parent=132 // loop_exit
        _
    $region133: #{word_encoder_forward.1} parent=1 // pred_fallthru
      _
    // Predicated region
    $region152: #{word_encoder_forward.1} parent=1 // pred_check
      _
    $region153: #{word_encoder_forward.1} parent=1 // pred_check_branch
      %210 = sbr.rel (0) target = $region155
    $region154: #{word_encoder_forward.1} parent=1 // pred_region
      %211 = vsyncadd %s177, 16
    $region155: #{word_encoder_forward.1} parent=1 // pred_fallthru
      _
    %s212 = sadd.s32 %s19, 5
    %s213 = sld [smem:[#allocation5 + %s212]]
    %s214 = scalar_lea.vmem %s2, %s213
    %s215 = scalar_lea.vmem [#allocation2], 5
    %s216 = scalar_lea.sflag [#allocation3], 5
    // Predicated region
    $region156: #{word_encoder_forward.1} parent=1 // pred_check
      _
    $region157: #{word_encoder_forward.1} parent=1 // pred_check_branch
      %218 = sbr.rel target = $region159
    $region158: #{word_encoder_forward.1} parent=1 // pred_region
      // Predicated region
      $region171: #{word_encoder_forward.1} parent=158 // pred_check
        _
      $region172: #{word_encoder_forward.1} parent=158 // pred_check_branch
        %234 = sbr.rel (0) target = $region174
      $region173: #{word_encoder_forward.1} parent=158 // pred_region
        %s236 = ssub.s32 2, 1
        loop: start=0, step=1, limit=1
        $region175: #{word_encoder_forward.1} parent=173 // loop_pre_header
          _
        $region176: #{word_encoder_forward.1} parent=173 // loop_header
          %s238 = sphi 0, %s242
          %p239 = scmp.ge.s32.totalorder %s238, 1
          %s243 = sphi %s214, %s214
          %s244 = sphi %s215, %s215
        $region177: #{word_encoder_forward.1} parent=173 // loop_header_branch
          %241 = sbr.rel (%p239) target = $region181
        $region178: #{word_encoder_forward.1} parent=173 // loop_body
          %v245 = vld [vmem:[%s243] sm:%s236]
          %246 = vst [vmem:[%s244] sm:%s236] %v245
        $region179: #{word_encoder_forward.1} parent=173 // loop_footer
          %s242 = sadd.s32 1, %s238
        $region180: #{word_encoder_forward.1} parent=173 // loop_footer_branch
          %237 = sbr.rel target = $region176
        $region181: #{word_encoder_forward.1} parent=173 // loop_exit
          _
      $region174: #{word_encoder_forward.1} parent=158 // pred_fallthru
        _
    $region159: #{word_encoder_forward.1} parent=1 // pred_fallthru
      _
    // Predicated region
    $region160: #{word_encoder_forward.1} parent=1 // pred_check
      _
    $region161: #{word_encoder_forward.1} parent=1 // pred_check_branch
      %220 = sbr.rel (0) target = $region163
    $region162: #{word_encoder_forward.1} parent=1 // pred_region
      %s222 = ssub.s32 2, 1
      loop: start=0, step=1, limit=1
      $region164: #{word_encoder_forward.1} parent=162 // loop_pre_header
        _
      $region165: #{word_encoder_forward.1} parent=162 // loop_header
        %s224 = sphi 0, %s228
        %p225 = scmp.ge.s32.totalorder %s224, 1
        %s229 = sphi %s214, %s214
        %s230 = sphi %s215, %s215
      $region166: #{word_encoder_forward.1} parent=162 // loop_header_branch
        %227 = sbr.rel (%p225) target = $region170
      $region167: #{word_encoder_forward.1} parent=162 // loop_body
        %v231 = vld [vmem:[%s229] sm:%s222]
        %232 = vst [vmem:[%s230] sm:%s222] %v231
      $region168: #{word_encoder_forward.1} parent=162 // loop_footer
        %s228 = sadd.s32 1, %s224
      $region169: #{word_encoder_forward.1} parent=162 // loop_footer_branch
        %223 = sbr.rel target = $region165
      $region170: #{word_encoder_forward.1} parent=162 // loop_exit
        _
    $region163: #{word_encoder_forward.1} parent=1 // pred_fallthru
      _
    // Predicated region
    $region182: #{word_encoder_forward.1} parent=1 // pred_check
      _
    $region183: #{word_encoder_forward.1} parent=1 // pred_check_branch
      %249 = sbr.rel (0) target = $region185
    $region184: #{word_encoder_forward.1} parent=1 // pred_region
      %250 = vsyncadd %s216, 16
    $region185: #{word_encoder_forward.1} parent=1 // pred_fallthru
      _
    %s251 = sadd.s32 %s19, 6
    %s252 = sld [smem:[#allocation5 + %s251]]
    %s253 = scalar_lea.vmem %s2, %s252
    %s254 = scalar_lea.vmem [#allocation2], 6
    %s255 = scalar_lea.sflag [#allocation3], 6
    // Predicated region
    $region186: #{word_encoder_forward.1} parent=1 // pred_check
      _
    $region187: #{word_encoder_forward.1} parent=1 // pred_check_branch
      %257 = sbr.rel target = $region189
    $region188: #{word_encoder_forward.1} parent=1 // pred_region
      // Predicated region
      $region201: #{word_encoder_forward.1} parent=188 // pred_check
        _
      $region202: #{word_encoder_forward.1} parent=188 // pred_check_branch
        %273 = sbr.rel (0) target = $region204
      $region203: #{word_encoder_forward.1} parent=188 // pred_region
        %s275 = ssub.s32 2, 1
        loop: start=0, step=1, limit=1
        $region205: #{word_encoder_forward.1} parent=203 // loop_pre_header
          _
        $region206: #{word_encoder_forward.1} parent=203 // loop_header
          %s277 = sphi 0, %s281
          %p278 = scmp.ge.s32.totalorder %s277, 1
          %s282 = sphi %s253, %s253
          %s283 = sphi %s254, %s254
        $region207: #{word_encoder_forward.1} parent=203 // loop_header_branch
          %280 = sbr.rel (%p278) target = $region211
        $region208: #{word_encoder_forward.1} parent=203 // loop_body
          %v284 = vld [vmem:[%s282] sm:%s275]
          %285 = vst [vmem:[%s283] sm:%s275] %v284
        $region209: #{word_encoder_forward.1} parent=203 // loop_footer
          %s281 = sadd.s32 1, %s277
        $region210: #{word_encoder_forward.1} parent=203 // loop_footer_branch
          %276 = sbr.rel target = $region206
        $region211: #{word_encoder_forward.1} parent=203 // loop_exit
          _
      $region204: #{word_encoder_forward.1} parent=188 // pred_fallthru
        _
    $region189: #{word_encoder_forward.1} parent=1 // pred_fallthru
      _
    // Predicated region
    $region190: #{word_encoder_forward.1} parent=1 // pred_check
      _
    $region191: #{word_encoder_forward.1} parent=1 // pred_check_branch
      %259 = sbr.rel (0) target = $region193
    $region192: #{word_encoder_forward.1} parent=1 // pred_region
      %s261 = ssub.s32 2, 1
      loop: start=0, step=1, limit=1
      $region194: #{word_encoder_forward.1} parent=192 // loop_pre_header
        _
      $region195: #{word_encoder_forward.1} parent=192 // loop_header
        %s263 = sphi 0, %s267
        %p264 = scmp.ge.s32.totalorder %s263, 1
        %s268 = sphi %s253, %s253
        %s269 = sphi %s254, %s254
      $region196: #{word_encoder_forward.1} parent=192 // loop_header_branch
        %266 = sbr.rel (%p264) target = $region200
      $region197: #{word_encoder_forward.1} parent=192 // loop_body
        %v270 = vld [vmem:[%s268] sm:%s261]
        %271 = vst [vmem:[%s269] sm:%s261] %v270
      $region198: #{word_encoder_forward.1} parent=192 // loop_footer
        %s267 = sadd.s32 1, %s263
      $region199: #{word_encoder_forward.1} parent=192 // loop_footer_branch
        %262 = sbr.rel target = $region195
      $region200: #{word_encoder_forward.1} parent=192 // loop_exit
        _
    $region193: #{word_encoder_forward.1} parent=1 // pred_fallthru
      _
    // Predicated region
    $region212: #{word_encoder_forward.1} parent=1 // pred_check
      _
    $region213: #{word_encoder_forward.1} parent=1 // pred_check_branch
      %288 = sbr.rel (0) target = $region215
    $region214: #{word_encoder_forward.1} parent=1 // pred_region
      %289 = vsyncadd %s255, 16
    $region215: #{word_encoder_forward.1} parent=1 // pred_fallthru
      _
    %s290 = sadd.s32 %s19, 7
    %s291 = sld [smem:[#allocation5 + %s290]]
    %s292 = scalar_lea.vmem %s2, %s291
    %s293 = scalar_lea.vmem [#allocation2], 7
    %s294 = scalar_lea.sflag [#allocation3], 7
    // Predicated region
    $region216: #{word_encoder_forward.1} parent=1 // pred_check
      _
    $region217: #{word_encoder_forward.1} parent=1 // pred_check_branch
      %296 = sbr.rel target = $region219
    $region218: #{word_encoder_forward.1} parent=1 // pred_region
      // Predicated region
      $region231: #{word_encoder_forward.1} parent=218 // pred_check
        _
      $region232: #{word_encoder_forward.1} parent=218 // pred_check_branch
        %312 = sbr.rel (0) target = $region234
      $region233: #{word_encoder_forward.1} parent=218 // pred_region
        %s314 = ssub.s32 2, 1
        loop: start=0, step=1, limit=1
        $region235: #{word_encoder_forward.1} parent=233 // loop_pre_header
          _
        $region236: #{word_encoder_forward.1} parent=233 // loop_header
          %s316 = sphi 0, %s320
          %p317 = scmp.ge.s32.totalorder %s316, 1
          %s321 = sphi %s292, %s292
          %s322 = sphi %s293, %s293
        $region237: #{word_encoder_forward.1} parent=233 // loop_header_branch
          %319 = sbr.rel (%p317) target = $region241
        $region238: #{word_encoder_forward.1} parent=233 // loop_body
          %v323 = vld [vmem:[%s321] sm:%s314]
          %324 = vst [vmem:[%s322] sm:%s314] %v323
        $region239: #{word_encoder_forward.1} parent=233 // loop_footer
          %s320 = sadd.s32 1, %s316
        $region240: #{word_encoder_forward.1} parent=233 // loop_footer_branch
          %315 = sbr.rel target = $region236
        $region241: #{word_encoder_forward.1} parent=233 // loop_exit
          _
      $region234: #{word_encoder_forward.1} parent=218 // pred_fallthru
        _
    $region219: #{word_encoder_forward.1} parent=1 // pred_fallthru
      _
    // Predicated region
    $region220: #{word_encoder_forward.1} parent=1 // pred_check
      _
    $region221: #{word_encoder_forward.1} parent=1 // pred_check_branch
      %298 = sbr.rel (0) target = $region223
    $region222: #{word_encoder_forward.1} parent=1 // pred_region
      %s300 = ssub.s32 2, 1
      loop: start=0, step=1, limit=1
      $region224: #{word_encoder_forward.1} parent=222 // loop_pre_header
        _
      $region225: #{word_encoder_forward.1} parent=222 // loop_header
        %s302 = sphi 0, %s306
        %p303 = scmp.ge.s32.totalorder %s302, 1
        %s307 = sphi %s292, %s292
        %s308 = sphi %s293, %s293
      $region226: #{word_encoder_forward.1} parent=222 // loop_header_branch
        %305 = sbr.rel (%p303) target = $region230
      $region227: #{word_encoder_forward.1} parent=222 // loop_body
        %v309 = vld [vmem:[%s307] sm:%s300]
        %310 = vst [vmem:[%s308] sm:%s300] %v309
      $region228: #{word_encoder_forward.1} parent=222 // loop_footer
        %s306 = sadd.s32 1, %s302
      $region229: #{word_encoder_forward.1} parent=222 // loop_footer_branch
        %301 = sbr.rel target = $region225
      $region230: #{word_encoder_forward.1} parent=222 // loop_exit
        _
    $region223: #{word_encoder_forward.1} parent=1 // pred_fallthru
      _
    // Predicated region
    $region242: #{word_encoder_forward.1} parent=1 // pred_check
      _
    $region243: #{word_encoder_forward.1} parent=1 // pred_check_branch
      %327 = sbr.rel (0) target = $region245
    $region244: #{word_encoder_forward.1} parent=1 // pred_region
      %328 = vsyncadd %s294, 16
    $region245: #{word_encoder_forward.1} parent=1 // pred_fallthru
      _
    %s329 = sadd.s32 %s19, 8
    %s330 = sld [smem:[#allocation5 + %s329]]
    %s331 = scalar_lea.vmem %s2, %s330
    %s332 = scalar_lea.vmem [#allocation2], 8
    %s333 = scalar_lea.sflag [#allocation3], 8
    // Predicated region
    $region246: #{word_encoder_forward.1} parent=1 // pred_check
      _
    $region247: #{word_encoder_forward.1} parent=1 // pred_check_branch
      %335 = sbr.rel target = $region249
    $region248: #{word_encoder_forward.1} parent=1 // pred_region
      // Predicated region
      $region261: #{word_encoder_forward.1} parent=248 // pred_check
        _
      $region262: #{word_encoder_forward.1} parent=248 // pred_check_branch
        %351 = sbr.rel (0) target = $region264
      $region263: #{word_encoder_forward.1} parent=248 // pred_region
        %s353 = ssub.s32 2, 1
        loop: start=0, step=1, limit=1
        $region265: #{word_encoder_forward.1} parent=263 // loop_pre_header
          _
        $region266: #{word_encoder_forward.1} parent=263 // loop_header
          %s355 = sphi 0, %s359
          %p356 = scmp.ge.s32.totalorder %s355, 1
          %s360 = sphi %s331, %s331
          %s361 = sphi %s332, %s332
        $region267: #{word_encoder_forward.1} parent=263 // loop_header_branch
          %358 = sbr.rel (%p356) target = $region271
        $region268: #{word_encoder_forward.1} parent=263 // loop_body
          %v362 = vld [vmem:[%s360] sm:%s353]
          %363 = vst [vmem:[%s361] sm:%s353] %v362
        $region269: #{word_encoder_forward.1} parent=263 // loop_footer
          %s359 = sadd.s32 1, %s355
        $region270: #{word_encoder_forward.1} parent=263 // loop_footer_branch
          %354 = sbr.rel target = $region266
        $region271: #{word_encoder_forward.1} parent=263 // loop_exit
          _
      $region264: #{word_encoder_forward.1} parent=248 // pred_fallthru
        _
    $region249: #{word_encoder_forward.1} parent=1 // pred_fallthru
      _
    // Predicated region
    $region250: #{word_encoder_forward.1} parent=1 // pred_check
      _
    $region251: #{word_encoder_forward.1} parent=1 // pred_check_branch
      %337 = sbr.rel (0) target = $region253
    $region252: #{word_encoder_forward.1} parent=1 // pred_region
      %s339 = ssub.s32 2, 1
      loop: start=0, step=1, limit=1
      $region254: #{word_encoder_forward.1} parent=252 // loop_pre_header
        _
      $region255: #{word_encoder_forward.1} parent=252 // loop_header
        %s341 = sphi 0, %s345
        %p342 = scmp.ge.s32.totalorder %s341, 1
        %s346 = sphi %s331, %s331
        %s347 = sphi %s332, %s332
      $region256: #{word_encoder_forward.1} parent=252 // loop_header_branch
        %344 = sbr.rel (%p342) target = $region260
      $region257: #{word_encoder_forward.1} parent=252 // loop_body
        %v348 = vld [vmem:[%s346] sm:%s339]
        %349 = vst [vmem:[%s347] sm:%s339] %v348
      $region258: #{word_encoder_forward.1} parent=252 // loop_footer
        %s345 = sadd.s32 1, %s341
      $region259: #{word_encoder_forward.1} parent=252 // loop_footer_branch
        %340 = sbr.rel target = $region255
      $region260: #{word_encoder_forward.1} parent=252 // loop_exit
        _
    $region253: #{word_encoder_forward.1} parent=1 // pred_fallthru
      _
    // Predicated region
    $region272: #{word_encoder_forward.1} parent=1 // pred_check
      _
    $region273: #{word_encoder_forward.1} parent=1 // pred_check_branch
      %366 = sbr.rel (0) target = $region275
    $region274: #{word_encoder_forward.1} parent=1 // pred_region
      %367 = vsyncadd %s333, 16
    $region275: #{word_encoder_forward.1} parent=1 // pred_fallthru
      _
    %s368 = sadd.s32 %s19, 9
    %s369 = sld [smem:[#allocation5 + %s368]]
    %s370 = scalar_lea.vmem %s2, %s369
    %s371 = scalar_lea.vmem [#allocation2], 9
    %s372 = scalar_lea.sflag [#allocation3], 9
    // Predicated region
    $region276: #{word_encoder_forward.1} parent=1 // pred_check
      _
    $region277: #{word_encoder_forward.1} parent=1 // pred_check_branch
      %374 = sbr.rel target = $region279
    $region278: #{word_encoder_forward.1} parent=1 // pred_region
      // Predicated region
      $region291: #{word_encoder_forward.1} parent=278 // pred_check
        _
      $region292: #{word_encoder_forward.1} parent=278 // pred_check_branch
        %390 = sbr.rel (0) target = $region294
      $region293: #{word_encoder_forward.1} parent=278 // pred_region
        %s392 = ssub.s32 2, 1
        loop: start=0, step=1, limit=1
        $region295: #{word_encoder_forward.1} parent=293 // loop_pre_header
          _
        $region296: #{word_encoder_forward.1} parent=293 // loop_header
          %s394 = sphi 0, %s398
          %p395 = scmp.ge.s32.totalorder %s394, 1
          %s399 = sphi %s370, %s370
          %s400 = sphi %s371, %s371
        $region297: #{word_encoder_forward.1} parent=293 // loop_header_branch
          %397 = sbr.rel (%p395) target = $region301
        $region298: #{word_encoder_forward.1} parent=293 // loop_body
          %v401 = vld [vmem:[%s399] sm:%s392]
          %402 = vst [vmem:[%s400] sm:%s392] %v401
        $region299: #{word_encoder_forward.1} parent=293 // loop_footer
          %s398 = sadd.s32 1, %s394
        $region300: #{word_encoder_forward.1} parent=293 // loop_footer_branch
          %393 = sbr.rel target = $region296
        $region301: #{word_encoder_forward.1} parent=293 // loop_exit
          _
      $region294: #{word_encoder_forward.1} parent=278 // pred_fallthru
        _
    $region279: #{word_encoder_forward.1} parent=1 // pred_fallthru
      _
    // Predicated region
    $region280: #{word_encoder_forward.1} parent=1 // pred_check
      _
    $region281: #{word_encoder_forward.1} parent=1 // pred_check_branch
      %376 = sbr.rel (0) target = $region283
    $region282: #{word_encoder_forward.1} parent=1 // pred_region
      %s378 = ssub.s32 2, 1
      loop: start=0, step=1, limit=1
      $region284: #{word_encoder_forward.1} parent=282 // loop_pre_header
        _
      $region285: #{word_encoder_forward.1} parent=282 // loop_header
        %s380 = sphi 0, %s384
        %p381 = scmp.ge.s32.totalorder %s380, 1
        %s385 = sphi %s370, %s370
        %s386 = sphi %s371, %s371
      $region286: #{word_encoder_forward.1} parent=282 // loop_header_branch
        %383 = sbr.rel (%p381) target = $region290
      $region287: #{word_encoder_forward.1} parent=282 // loop_body
        %v387 = vld [vmem:[%s385] sm:%s378]
        %388 = vst [vmem:[%s386] sm:%s378] %v387
      $region288: #{word_encoder_forward.1} parent=282 // loop_footer
        %s384 = sadd.s32 1, %s380
      $region289: #{word_encoder_forward.1} parent=282 // loop_footer_branch
        %379 = sbr.rel target = $region285
      $region290: #{word_encoder_forward.1} parent=282 // loop_exit
        _
    $region283: #{word_encoder_forward.1} parent=1 // pred_fallthru
      _
    // Predicated region
    $region302: #{word_encoder_forward.1} parent=1 // pred_check
      _
    $region303: #{word_encoder_forward.1} parent=1 // pred_check_branch
      %405 = sbr.rel (0) target = $region305
    $region304: #{word_encoder_forward.1} parent=1 // pred_region
      %406 = vsyncadd %s372, 16
    $region305: #{word_encoder_forward.1} parent=1 // pred_fallthru
      _
    %s407 = sadd.s32 %s19, 10
    %s408 = sld [smem:[#allocation5 + %s407]]
    %s409 = scalar_lea.vmem %s2, %s408
    %s410 = scalar_lea.vmem [#allocation2], 10
    %s411 = scalar_lea.sflag [#allocation3], 10
    // Predicated region
    $region306: #{word_encoder_forward.1} parent=1 // pred_check
      _
    $region307: #{word_encoder_forward.1} parent=1 // pred_check_branch
      %413 = sbr.rel target = $region309
    $region308: #{word_encoder_forward.1} parent=1 // pred_region
      // Predicated region
      $region321: #{word_encoder_forward.1} parent=308 // pred_check
        _
      $region322: #{word_encoder_forward.1} parent=308 // pred_check_branch
        %429 = sbr.rel (0) target = $region324
      $region323: #{word_encoder_forward.1} parent=308 // pred_region
        %s431 = ssub.s32 2, 1
        loop: start=0, step=1, limit=1
        $region325: #{word_encoder_forward.1} parent=323 // loop_pre_header
          _
        $region326: #{word_encoder_forward.1} parent=323 // loop_header
          %s433 = sphi 0, %s437
          %p434 = scmp.ge.s32.totalorder %s433, 1
          %s438 = sphi %s409, %s409
          %s439 = sphi %s410, %s410
        $region327: #{word_encoder_forward.1} parent=323 // loop_header_branch
          %436 = sbr.rel (%p434) target = $region331
        $region328: #{word_encoder_forward.1} parent=323 // loop_body
          %v440 = vld [vmem:[%s438] sm:%s431]
          %441 = vst [vmem:[%s439] sm:%s431] %v440
        $region329: #{word_encoder_forward.1} parent=323 // loop_footer
          %s437 = sadd.s32 1, %s433
        $region330: #{word_encoder_forward.1} parent=323 // loop_footer_branch
          %432 = sbr.rel target = $region326
        $region331: #{word_encoder_forward.1} parent=323 // loop_exit
          _
      $region324: #{word_encoder_forward.1} parent=308 // pred_fallthru
        _
    $region309: #{word_encoder_forward.1} parent=1 // pred_fallthru
      _
    // Predicated region
    $region310: #{word_encoder_forward.1} parent=1 // pred_check
      _
    $region311: #{word_encoder_forward.1} parent=1 // pred_check_branch
      %415 = sbr.rel (0) target = $region313
    $region312: #{word_encoder_forward.1} parent=1 // pred_region
      %s417 = ssub.s32 2, 1
      loop: start=0, step=1, limit=1
      $region314: #{word_encoder_forward.1} parent=312 // loop_pre_header
        _
      $region315: #{word_encoder_forward.1} parent=312 // loop_header
        %s419 = sphi 0, %s423
        %p420 = scmp.ge.s32.totalorder %s419, 1
        %s424 = sphi %s409, %s409
        %s425 = sphi %s410, %s410
      $region316: #{word_encoder_forward.1} parent=312 // loop_header_branch
        %422 = sbr.rel (%p420) target = $region320
      $region317: #{word_encoder_forward.1} parent=312 // loop_body
        %v426 = vld [vmem:[%s424] sm:%s417]
        %427 = vst [vmem:[%s425] sm:%s417] %v426
      $region318: #{word_encoder_forward.1} parent=312 // loop_footer
        %s423 = sadd.s32 1, %s419
      $region319: #{word_encoder_forward.1} parent=312 // loop_footer_branch
        %418 = sbr.rel target = $region315
      $region320: #{word_encoder_forward.1} parent=312 // loop_exit
        _
    $region313: #{word_encoder_forward.1} parent=1 // pred_fallthru
      _
    // Predicated region
    $region332: #{word_encoder_forward.1} parent=1 // pred_check
      _
    $region333: #{word_encoder_forward.1} parent=1 // pred_check_branch
      %444 = sbr.rel (0) target = $region335
    $region334: #{word_encoder_forward.1} parent=1 // pred_region
      %445 = vsyncadd %s411, 16
    $region335: #{word_encoder_forward.1} parent=1 // pred_fallthru
      _
    %s446 = sadd.s32 %s19, 11
    %s447 = sld [smem:[#allocation5 + %s446]]
    %s448 = scalar_lea.vmem %s2, %s447
    %s449 = scalar_lea.vmem [#allocation2], 11
    %s450 = scalar_lea.sflag [#allocation3], 11
    // Predicated region
    $region336: #{word_encoder_forward.1} parent=1 // pred_check
      _
    $region337: #{word_encoder_forward.1} parent=1 // pred_check_branch
      %452 = sbr.rel target = $region339
    $region338: #{word_encoder_forward.1} parent=1 // pred_region
      // Predicated region
      $region351: #{word_encoder_forward.1} parent=338 // pred_check
        _
      $region352: #{word_encoder_forward.1} parent=338 // pred_check_branch
        %468 = sbr.rel (0) target = $region354
      $region353: #{word_encoder_forward.1} parent=338 // pred_region
        %s470 = ssub.s32 2, 1
        loop: start=0, step=1, limit=1
        $region355: #{word_encoder_forward.1} parent=353 // loop_pre_header
          _
        $region356: #{word_encoder_forward.1} parent=353 // loop_header
          %s472 = sphi 0, %s476
          %p473 = scmp.ge.s32.totalorder %s472, 1
          %s477 = sphi %s448, %s448
          %s478 = sphi %s449, %s449
        $region357: #{word_encoder_forward.1} parent=353 // loop_header_branch
          %475 = sbr.rel (%p473) target = $region361
        $region358: #{word_encoder_forward.1} parent=353 // loop_body
          %v479 = vld [vmem:[%s477] sm:%s470]
          %480 = vst [vmem:[%s478] sm:%s470] %v479
        $region359: #{word_encoder_forward.1} parent=353 // loop_footer
          %s476 = sadd.s32 1, %s472
        $region360: #{word_encoder_forward.1} parent=353 // loop_footer_branch
          %471 = sbr.rel target = $region356
        $region361: #{word_encoder_forward.1} parent=353 // loop_exit
          _
      $region354: #{word_encoder_forward.1} parent=338 // pred_fallthru
        _
    $region339: #{word_encoder_forward.1} parent=1 // pred_fallthru
      _
    // Predicated region
    $region340: #{word_encoder_forward.1} parent=1 // pred_check
      _
    $region341: #{word_encoder_forward.1} parent=1 // pred_check_branch
      %454 = sbr.rel (0) target = $region343
    $region342: #{word_encoder_forward.1} parent=1 // pred_region
      %s456 = ssub.s32 2, 1
      loop: start=0, step=1, limit=1
      $region344: #{word_encoder_forward.1} parent=342 // loop_pre_header
        _
      $region345: #{word_encoder_forward.1} parent=342 // loop_header
        %s458 = sphi 0, %s462
        %p459 = scmp.ge.s32.totalorder %s458, 1
        %s463 = sphi %s448, %s448
        %s464 = sphi %s449, %s449
      $region346: #{word_encoder_forward.1} parent=342 // loop_header_branch
        %461 = sbr.rel (%p459) target = $region350
      $region347: #{word_encoder_forward.1} parent=342 // loop_body
        %v465 = vld [vmem:[%s463] sm:%s456]
        %466 = vst [vmem:[%s464] sm:%s456] %v465
      $region348: #{word_encoder_forward.1} parent=342 // loop_footer
        %s462 = sadd.s32 1, %s458
      $region349: #{word_encoder_forward.1} parent=342 // loop_footer_branch
        %457 = sbr.rel target = $region345
      $region350: #{word_encoder_forward.1} parent=342 // loop_exit
        _
    $region343: #{word_encoder_forward.1} parent=1 // pred_fallthru
      _
    // Predicated region
    $region362: #{word_encoder_forward.1} parent=1 // pred_check
      _
    $region363: #{word_encoder_forward.1} parent=1 // pred_check_branch
      %483 = sbr.rel (0) target = $region365
    $region364: #{word_encoder_forward.1} parent=1 // pred_region
      %484 = vsyncadd %s450, 16
    $region365: #{word_encoder_forward.1} parent=1 // pred_fallthru
      _
    %s485 = sadd.s32 %s19, 12
    %s486 = sld [smem:[#allocation5 + %s485]]
    %s487 = scalar_lea.vmem %s2, %s486
    %s488 = scalar_lea.vmem [#allocation2], 12
    %s489 = scalar_lea.sflag [#allocation3], 12
    // Predicated region
    $region366: #{word_encoder_forward.1} parent=1 // pred_check
      _
    $region367: #{word_encoder_forward.1} parent=1 // pred_check_branch
      %491 = sbr.rel target = $region369
    $region368: #{word_encoder_forward.1} parent=1 // pred_region
      // Predicated region
      $region381: #{word_encoder_forward.1} parent=368 // pred_check
        _
      $region382: #{word_encoder_forward.1} parent=368 // pred_check_branch
        %507 = sbr.rel (0) target = $region384
      $region383: #{word_encoder_forward.1} parent=368 // pred_region
        %s509 = ssub.s32 2, 1
        loop: start=0, step=1, limit=1
        $region385: #{word_encoder_forward.1} parent=383 // loop_pre_header
          _
        $region386: #{word_encoder_forward.1} parent=383 // loop_header
          %s511 = sphi 0, %s515
          %p512 = scmp.ge.s32.totalorder %s511, 1
          %s516 = sphi %s487, %s487
          %s517 = sphi %s488, %s488
        $region387: #{word_encoder_forward.1} parent=383 // loop_header_branch
          %514 = sbr.rel (%p512) target = $region391
        $region388: #{word_encoder_forward.1} parent=383 // loop_body
          %v518 = vld [vmem:[%s516] sm:%s509]
          %519 = vst [vmem:[%s517] sm:%s509] %v518
        $region389: #{word_encoder_forward.1} parent=383 // loop_footer
          %s515 = sadd.s32 1, %s511
        $region390: #{word_encoder_forward.1} parent=383 // loop_footer_branch
          %510 = sbr.rel target = $region386
        $region391: #{word_encoder_forward.1} parent=383 // loop_exit
          _
      $region384: #{word_encoder_forward.1} parent=368 // pred_fallthru
        _
    $region369: #{word_encoder_forward.1} parent=1 // pred_fallthru
      _
    // Predicated region
    $region370: #{word_encoder_forward.1} parent=1 // pred_check
      _
    $region371: #{word_encoder_forward.1} parent=1 // pred_check_branch
      %493 = sbr.rel (0) target = $region373
    $region372: #{word_encoder_forward.1} parent=1 // pred_region
      %s495 = ssub.s32 2, 1
      loop: start=0, step=1, limit=1
      $region374: #{word_encoder_forward.1} parent=372 // loop_pre_header
        _
      $region375: #{word_encoder_forward.1} parent=372 // loop_header
        %s497 = sphi 0, %s501
        %p498 = scmp.ge.s32.totalorder %s497, 1
        %s502 = sphi %s487, %s487
        %s503 = sphi %s488, %s488
      $region376: #{word_encoder_forward.1} parent=372 // loop_header_branch
        %500 = sbr.rel (%p498) target = $region380
      $region377: #{word_encoder_forward.1} parent=372 // loop_body
        %v504 = vld [vmem:[%s502] sm:%s495]
        %505 = vst [vmem:[%s503] sm:%s495] %v504
      $region378: #{word_encoder_forward.1} parent=372 // loop_footer
        %s501 = sadd.s32 1, %s497
      $region379: #{word_encoder_forward.1} parent=372 // loop_footer_branch
        %496 = sbr.rel target = $region375
      $region380: #{word_encoder_forward.1} parent=372 // loop_exit
        _
    $region373: #{word_encoder_forward.1} parent=1 // pred_fallthru
      _
    // Predicated region
    $region392: #{word_encoder_forward.1} parent=1 // pred_check
      _
    $region393: #{word_encoder_forward.1} parent=1 // pred_check_branch
      %522 = sbr.rel (0) target = $region395
    $region394: #{word_encoder_forward.1} parent=1 // pred_region
      %523 = vsyncadd %s489, 16
    $region395: #{word_encoder_forward.1} parent=1 // pred_fallthru
      _
    %s524 = sadd.s32 %s19, 13
    %s525 = sld [smem:[#allocation5 + %s524]]
    %s526 = scalar_lea.vmem %s2, %s525
    %s527 = scalar_lea.vmem [#allocation2], 13
    %s528 = scalar_lea.sflag [#allocation3], 13
    // Predicated region
    $region396: #{word_encoder_forward.1} parent=1 // pred_check
      _
    $region397: #{word_encoder_forward.1} parent=1 // pred_check_branch
      %530 = sbr.rel target = $region399
    $region398: #{word_encoder_forward.1} parent=1 // pred_region
      // Predicated region
      $region411: #{word_encoder_forward.1} parent=398 // pred_check
        _
      $region412: #{word_encoder_forward.1} parent=398 // pred_check_branch
        %546 = sbr.rel (0) target = $region414
      $region413: #{word_encoder_forward.1} parent=398 // pred_region
        %s548 = ssub.s32 2, 1
        loop: start=0, step=1, limit=1
        $region415: #{word_encoder_forward.1} parent=413 // loop_pre_header
          _
        $region416: #{word_encoder_forward.1} parent=413 // loop_header
          %s550 = sphi 0, %s554
          %p551 = scmp.ge.s32.totalorder %s550, 1
          %s555 = sphi %s526, %s526
          %s556 = sphi %s527, %s527
        $region417: #{word_encoder_forward.1} parent=413 // loop_header_branch
          %553 = sbr.rel (%p551) target = $region421
        $region418: #{word_encoder_forward.1} parent=413 // loop_body
          %v557 = vld [vmem:[%s555] sm:%s548]
          %558 = vst [vmem:[%s556] sm:%s548] %v557
        $region419: #{word_encoder_forward.1} parent=413 // loop_footer
          %s554 = sadd.s32 1, %s550
        $region420: #{word_encoder_forward.1} parent=413 // loop_footer_branch
          %549 = sbr.rel target = $region416
        $region421: #{word_encoder_forward.1} parent=413 // loop_exit
          _
      $region414: #{word_encoder_forward.1} parent=398 // pred_fallthru
        _
    $region399: #{word_encoder_forward.1} parent=1 // pred_fallthru
      _
    // Predicated region
    $region400: #{word_encoder_forward.1} parent=1 // pred_check
      _
    $region401: #{word_encoder_forward.1} parent=1 // pred_check_branch
      %532 = sbr.rel (0) target = $region403
    $region402: #{word_encoder_forward.1} parent=1 // pred_region
      %s534 = ssub.s32 2, 1
      loop: start=0, step=1, limit=1
      $region404: #{word_encoder_forward.1} parent=402 // loop_pre_header
        _
      $region405: #{word_encoder_forward.1} parent=402 // loop_header
        %s536 = sphi 0, %s540
        %p537 = scmp.ge.s32.totalorder %s536, 1
        %s541 = sphi %s526, %s526
        %s542 = sphi %s527, %s527
      $region406: #{word_encoder_forward.1} parent=402 // loop_header_branch
        %539 = sbr.rel (%p537) target = $region410
      $region407: #{word_encoder_forward.1} parent=402 // loop_body
        %v543 = vld [vmem:[%s541] sm:%s534]
        %544 = vst [vmem:[%s542] sm:%s534] %v543
      $region408: #{word_encoder_forward.1} parent=402 // loop_footer
        %s540 = sadd.s32 1, %s536
      $region409: #{word_encoder_forward.1} parent=402 // loop_footer_branch
        %535 = sbr.rel target = $region405
      $region410: #{word_encoder_forward.1} parent=402 // loop_exit
        _
    $region403: #{word_encoder_forward.1} parent=1 // pred_fallthru
      _
    // Predicated region
    $region422: #{word_encoder_forward.1} parent=1 // pred_check
      _
    $region423: #{word_encoder_forward.1} parent=1 // pred_check_branch
      %561 = sbr.rel (0) target = $region425
    $region424: #{word_encoder_forward.1} parent=1 // pred_region
      %562 = vsyncadd %s528, 16
    $region425: #{word_encoder_forward.1} parent=1 // pred_fallthru
      _
    %s563 = sadd.s32 %s19, 14
    %s564 = sld [smem:[#allocation5 + %s563]]
    %s565 = scalar_lea.vmem %s2, %s564
    %s566 = scalar_lea.vmem [#allocation2], 14
    %s567 = scalar_lea.sflag [#allocation3], 14
    // Predicated region
    $region426: #{word_encoder_forward.1} parent=1 // pred_check
      _
    $region427: #{word_encoder_forward.1} parent=1 // pred_check_branch
      %569 = sbr.rel target = $region429
    $region428: #{word_encoder_forward.1} parent=1 // pred_region
      // Predicated region
      $region441: #{word_encoder_forward.1} parent=428 // pred_check
        _
      $region442: #{word_encoder_forward.1} parent=428 // pred_check_branch
        %585 = sbr.rel (0) target = $region444
      $region443: #{word_encoder_forward.1} parent=428 // pred_region
        %s587 = ssub.s32 2, 1
        loop: start=0, step=1, limit=1
        $region445: #{word_encoder_forward.1} parent=443 // loop_pre_header
          _
        $region446: #{word_encoder_forward.1} parent=443 // loop_header
          %s589 = sphi 0, %s593
          %p590 = scmp.ge.s32.totalorder %s589, 1
          %s594 = sphi %s565, %s565
          %s595 = sphi %s566, %s566
        $region447: #{word_encoder_forward.1} parent=443 // loop_header_branch
          %592 = sbr.rel (%p590) target = $region451
        $region448: #{word_encoder_forward.1} parent=443 // loop_body
          %v596 = vld [vmem:[%s594] sm:%s587]
          %597 = vst [vmem:[%s595] sm:%s587] %v596
        $region449: #{word_encoder_forward.1} parent=443 // loop_footer
          %s593 = sadd.s32 1, %s589
        $region450: #{word_encoder_forward.1} parent=443 // loop_footer_branch
          %588 = sbr.rel target = $region446
        $region451: #{word_encoder_forward.1} parent=443 // loop_exit
          _
      $region444: #{word_encoder_forward.1} parent=428 // pred_fallthru
        _
    $region429: #{word_encoder_forward.1} parent=1 // pred_fallthru
      _
    // Predicated region
    $region430: #{word_encoder_forward.1} parent=1 // pred_check
      _
    $region431: #{word_encoder_forward.1} parent=1 // pred_check_branch
      %571 = sbr.rel (0) target = $region433
    $region432: #{word_encoder_forward.1} parent=1 // pred_region
      %s573 = ssub.s32 2, 1
      loop: start=0, step=1, limit=1
      $region434: #{word_encoder_forward.1} parent=432 // loop_pre_header
        _
      $region435: #{word_encoder_forward.1} parent=432 // loop_header
        %s575 = sphi 0, %s579
        %p576 = scmp.ge.s32.totalorder %s575, 1
        %s580 = sphi %s565, %s565
        %s581 = sphi %s566, %s566
      $region436: #{word_encoder_forward.1} parent=432 // loop_header_branch
        %578 = sbr.rel (%p576) target = $region440
      $region437: #{word_encoder_forward.1} parent=432 // loop_body
        %v582 = vld [vmem:[%s580] sm:%s573]
        %583 = vst [vmem:[%s581] sm:%s573] %v582
      $region438: #{word_encoder_forward.1} parent=432 // loop_footer
        %s579 = sadd.s32 1, %s575
      $region439: #{word_encoder_forward.1} parent=432 // loop_footer_branch
        %574 = sbr.rel target = $region435
      $region440: #{word_encoder_forward.1} parent=432 // loop_exit
        _
    $region433: #{word_encoder_forward.1} parent=1 // pred_fallthru
      _
    // Predicated region
    $region452: #{word_encoder_forward.1} parent=1 // pred_check
      _
    $region453: #{word_encoder_forward.1} parent=1 // pred_check_branch
      %600 = sbr.rel (0) target = $region455
    $region454: #{word_encoder_forward.1} parent=1 // pred_region
      %601 = vsyncadd %s567, 16
    $region455: #{word_encoder_forward.1} parent=1 // pred_fallthru
      _
    %s602 = sadd.s32 %s19, 15
    %s603 = sld [smem:[#allocation5 + %s602]]
    %s604 = scalar_lea.vmem %s2, %s603
    %s605 = scalar_lea.vmem [#allocation2], 15
    %s606 = scalar_lea.sflag [#allocation3], 15
    // Predicated region
    $region456: #{word_encoder_forward.1} parent=1 // pred_check
      _
    $region457: #{word_encoder_forward.1} parent=1 // pred_check_branch
      %608 = sbr.rel target = $region459
    $region458: #{word_encoder_forward.1} parent=1 // pred_region
      // Predicated region
      $region471: #{word_encoder_forward.1} parent=458 // pred_check
        _
      $region472: #{word_encoder_forward.1} parent=458 // pred_check_branch
        %624 = sbr.rel (0) target = $region474
      $region473: #{word_encoder_forward.1} parent=458 // pred_region
        %s626 = ssub.s32 2, 1
        loop: start=0, step=1, limit=1
        $region475: #{word_encoder_forward.1} parent=473 // loop_pre_header
          _
        $region476: #{word_encoder_forward.1} parent=473 // loop_header
          %s628 = sphi 0, %s632
          %p629 = scmp.ge.s32.totalorder %s628, 1
          %s633 = sphi %s604, %s604
          %s634 = sphi %s605, %s605
        $region477: #{word_encoder_forward.1} parent=473 // loop_header_branch
          %631 = sbr.rel (%p629) target = $region481
        $region478: #{word_encoder_forward.1} parent=473 // loop_body
          %v635 = vld [vmem:[%s633] sm:%s626]
          %636 = vst [vmem:[%s634] sm:%s626] %v635
        $region479: #{word_encoder_forward.1} parent=473 // loop_footer
          %s632 = sadd.s32 1, %s628
        $region480: #{word_encoder_forward.1} parent=473 // loop_footer_branch
          %627 = sbr.rel target = $region476
        $region481: #{word_encoder_forward.1} parent=473 // loop_exit
          _
      $region474: #{word_encoder_forward.1} parent=458 // pred_fallthru
        _
    $region459: #{word_encoder_forward.1} parent=1 // pred_fallthru
      _
    // Predicated region
    $region460: #{word_encoder_forward.1} parent=1 // pred_check
      _
    $region461: #{word_encoder_forward.1} parent=1 // pred_check_branch
      %610 = sbr.rel (0) target = $region463
    $region462: #{word_encoder_forward.1} parent=1 // pred_region
      %s612 = ssub.s32 2, 1
      loop: start=0, step=1, limit=1
      $region464: #{word_encoder_forward.1} parent=462 // loop_pre_header
        _
      $region465: #{word_encoder_forward.1} parent=462 // loop_header
        %s614 = sphi 0, %s618
        %p615 = scmp.ge.s32.totalorder %s614, 1
        %s619 = sphi %s604, %s604
        %s620 = sphi %s605, %s605
      $region466: #{word_encoder_forward.1} parent=462 // loop_header_branch
        %617 = sbr.rel (%p615) target = $region470
      $region467: #{word_encoder_forward.1} parent=462 // loop_body
        %v621 = vld [vmem:[%s619] sm:%s612]
        %622 = vst [vmem:[%s620] sm:%s612] %v621
      $region468: #{word_encoder_forward.1} parent=462 // loop_footer
        %s618 = sadd.s32 1, %s614
      $region469: #{word_encoder_forward.1} parent=462 // loop_footer_branch
        %613 = sbr.rel target = $region465
      $region470: #{word_encoder_forward.1} parent=462 // loop_exit
        _
    $region463: #{word_encoder_forward.1} parent=1 // pred_fallthru
      _
    // Predicated region
    $region482: #{word_encoder_forward.1} parent=1 // pred_check
      _
    $region483: #{word_encoder_forward.1} parent=1 // pred_check_branch
      %639 = sbr.rel (0) target = $region485
    $region484: #{word_encoder_forward.1} parent=1 // pred_region
      %640 = vsyncadd %s606, 16
    $region485: #{word_encoder_forward.1} parent=1 // pred_fallthru
      _
    %s641 = smul.u32 1, 1
    %s642 = sshll.u32 %s641, 4
    %643 = dma.done [#allocation3], %s642
    %s644 = sshll.u32 %s641, 4
    %645 = dma.done %s60, %s644
    %s646 = sshll.u32 %s641, 4
    %647 = dma.done %s99, %s646
    %s648 = sshll.u32 %s641, 4
    %649 = dma.done %s138, %s648
    %s650 = sshll.u32 %s641, 4
    %651 = dma.done %s177, %s650
    %s652 = sshll.u32 %s641, 4
    %653 = dma.done %s216, %s652
    %s654 = sshll.u32 %s641, 4
    %655 = dma.done %s255, %s654
    %s656 = sshll.u32 %s641, 4
    %657 = dma.done %s294, %s656
    %s658 = sshll.u32 %s641, 4
    %659 = dma.done %s333, %s658
    %s660 = sshll.u32 %s641, 4
    %661 = dma.done %s372, %s660
    %s662 = sshll.u32 %s641, 4
    %663 = dma.done %s411, %s662
    %s664 = sshll.u32 %s641, 4
    %665 = dma.done %s450, %s664
    %s666 = sshll.u32 %s641, 4
    %667 = dma.done %s489, %s666
    %s668 = sshll.u32 %s641, 4
    %669 = dma.done %s528, %s668
    %s670 = sshll.u32 %s641, 4
    %671 = dma.done %s567, %s670
    %s672 = sshll.u32 %s641, 4
    %673 = dma.done %s606, %s672
    %v674 = vld [vmem:[#allocation2] sm:$0xff]
    %v675 = vld [vmem:[#allocation2 + $0x8] sm:$0xff]
    %v676 = vld [vmem:[%s1] sm:$0xff]
    %v677 = vld [vmem:[%s1 + $0x8] sm:$0xff]
    %679 = vset.pattern.permute.xlu0 0
    %680 = vperm.xlu0 %679, %v676
    %v681 = vpop.permute.xlu0 %680
    %684 = vset.pattern.permute.xlu0 0
    %685 = vperm.xlu0 %684, %v677
    %v686 = vpop.permute.xlu0 %685
    %v688 = vmul.f32 %v674, %v681
    %v689 = vmul.f32 %v675, %v686
    %vm690 = vcmask 261120
    %691 = vst.msk [vmem:[#allocation6] sm:$0xff] %vm690, %v688
    %692 = vst.msk [vmem:[#allocation6 + $0x8] sm:$0xff] %vm690, %v689
    // Predicated region
    $region486: #{word_encoder_forward.1} parent=1 // pred_check
      _
    $region487: #{word_encoder_forward.1} parent=1 // pred_check_branch
      %694 = sbr.rel (0) target = $region489
    $region488: #{word_encoder_forward.1} parent=1 // pred_region
      %696 = vsyncadd [#allocation7], 0
      %s697 = sshll.u32 [#allocation6], 4
      %s698 = int_to_ptr.vmem [resolvable:$true] %s697
      %s699 = sshll.u32 %s3, 4
      %s700 = int_to_ptr.hbm [resolvable:$true] %s699
      %705 = dma.vmem_to_hbm [thread:$0]  %s698, 256, %s700, [#allocation7], 128, 128, 8
    $region489: #{word_encoder_forward.1} parent=1 // pred_fallthru
      _
    // Predicated region
    $region490: #{word_encoder_forward.1} parent=1 // pred_check
      _
    $region491: #{word_encoder_forward.1} parent=1 // pred_check_branch
      %707 = sbr.rel (0) target = $region493
    $region492: #{word_encoder_forward.1} parent=1 // pred_region
      %709 = dma.done [#allocation7], 256
    $region493: #{word_encoder_forward.1} parent=1 // pred_fallthru
      _
    %710 = vsyncpa [#allocation7], 1
  %711 = vsyncmov [#allocation3]
  %s712 = vpop.sfrf %711
  %p713 = scmp.eq.s32.totalorder %s712, 0
  %p714 = pneg %p713
  %716 = shalt.err (%p714)
  %s717 = scalar_lea.sflag [#allocation3], 1
  %718 = vsyncmov %s717
  %s719 = vpop.sfrf %718
  %p720 = scmp.eq.s32.totalorder %s719, 0
  %p721 = pneg %p720
  %723 = shalt.err (%p721)
  %s724 = scalar_lea.sflag [#allocation3], 2
  %725 = vsyncmov %s724
  %s726 = vpop.sfrf %725
  %p727 = scmp.eq.s32.totalorder %s726, 0
  %p728 = pneg %p727
  %730 = shalt.err (%p728)
  %s731 = scalar_lea.sflag [#allocation3], 3
  %732 = vsyncmov %s731
  %s733 = vpop.sfrf %732
  %p734 = scmp.eq.s32.totalorder %s733, 0
  %p735 = pneg %p734
  %737 = shalt.err (%p735)
  %s738 = scalar_lea.sflag [#allocation3], 4
  %739 = vsyncmov %s738
  %s740 = vpop.sfrf %739
  %p741 = scmp.eq.s32.totalorder %s740, 0
  %p742 = pneg %p741
  %744 = shalt.err (%p742)
  %s745 = scalar_lea.sflag [#allocation3], 5
  %746 = vsyncmov %s745
  %s747 = vpop.sfrf %746
  %p748 = scmp.eq.s32.totalorder %s747, 0
  %p749 = pneg %p748
  %751 = shalt.err (%p749)
  %s752 = scalar_lea.sflag [#allocation3], 6
  %753 = vsyncmov %s752
  %s754 = vpop.sfrf %753
  %p755 = scmp.eq.s32.totalorder %s754, 0
  %p756 = pneg %p755
  %758 = shalt.err (%p756)
  %s759 = scalar_lea.sflag [#allocation3], 7
  %760 = vsyncmov %s759
  %s761 = vpop.sfrf %760
  %p762 = scmp.eq.s32.totalorder %s761, 0
  %p763 = pneg %p762
  %765 = shalt.err (%p763)
  %s766 = scalar_lea.sflag [#allocation3], 8
  %767 = vsyncmov %s766
  %s768 = vpop.sfrf %767
  %p769 = scmp.eq.s32.totalorder %s768, 0
  %p770 = pneg %p769
  %772 = shalt.err (%p770)
  %s773 = scalar_lea.sflag [#allocation3], 9
  %774 = vsyncmov %s773
  %s775 = vpop.sfrf %774
  %p776 = scmp.eq.s32.totalorder %s775, 0
  %p777 = pneg %p776
  %779 = shalt.err (%p777)
  %s780 = scalar_lea.sflag [#allocation3], 10
  %781 = vsyncmov %s780
  %s782 = vpop.sfrf %781
  %p783 = scmp.eq.s32.totalorder %s782, 0
  %p784 = pneg %p783
  %786 = shalt.err (%p784)
  %s787 = scalar_lea.sflag [#allocation3], 11
  %788 = vsyncmov %s787
  %s789 = vpop.sfrf %788
  %p790 = scmp.eq.s32.totalorder %s789, 0
  %p791 = pneg %p790
  %793 = shalt.err (%p791)
  %s794 = scalar_lea.sflag [#allocation3], 12
  %795 = vsyncmov %s794
  %s796 = vpop.sfrf %795
  %p797 = scmp.eq.s32.totalorder %s796, 0
  %p798 = pneg %p797
  %800 = shalt.err (%p798)
  %s801 = scalar_lea.sflag [#allocation3], 13
  %802 = vsyncmov %s801
  %s803 = vpop.sfrf %802
  %p804 = scmp.eq.s32.totalorder %s803, 0
  %p805 = pneg %p804
  %807 = shalt.err (%p805)
  %s808 = scalar_lea.sflag [#allocation3], 14
  %809 = vsyncmov %s808
  %s810 = vpop.sfrf %809
  %p811 = scmp.eq.s32.totalorder %s810, 0
  %p812 = pneg %p811
  %814 = shalt.err (%p812)
  %s815 = scalar_lea.sflag [#allocation3], 15
  %816 = vsyncmov %s815
  %s817 = vpop.sfrf %816
  %p818 = scmp.eq.s32.totalorder %s817, 0
  %p819 = pneg %p818
  %821 = shalt.err (%p819)

</llo_original>
